<compile_context>
chip_gen: v7x
topology: tpu7x:2x2x1
jax: 0.10.0
libtpu: 0.0.40
codegen_flags: <defaults>
</compile_context>

<pallas_src>
import functools

import jax
import jax.numpy as jnp
from jax.experimental import pallas as pl
from jax.experimental.pallas import tpu as pltpu

HIDDEN = 128  # fixed by the module: GCNConv(node_features, 128), GCNConv(128, 128)


def hive_gnn_kernel(a_ref, x_ref, w_ref, b_ref, pool_ref, out_ref, *,
                    num_actions, f_pad):
    a = a_ref[...]                                     # f32 [N_pad, N_pad]

    # Static slices of the packed weight / bias slabs (zero runtime cost).
    w1 = w_ref[0:f_pad, 0:HIDDEN]                      # bf16 [f_pad, 128]
    w2 = w_ref[f_pad:f_pad + HIDDEN, 0:HIDDEN]         # bf16 [128, 128]
    wh = w_ref[f_pad + HIDDEN:f_pad + 2 * HIDDEN, :]   # bf16 [128, head_pad]
    b1 = b_ref[0:1, 0:HIDDEN]                          # f32  [1, 128]
    b2 = b_ref[1:2, 0:HIDDEN]
    bh = b_ref[2:3, :]                                 # f32  [1, head_pad]

    # GCN layer 1: ReLU( A_hat @ (X @ W1) + b1 )   (bf16 MXU inputs, f32 acc;
    # the A_hat matmul stays f32 for D^{-1/2} precision)
    xw = jnp.dot(x_ref[...], w1, preferred_element_type=jnp.float32)
    h1 = jnp.dot(a, xw, preferred_element_type=jnp.float32) + b1
    h1 = jnp.maximum(h1, 0.0)                          # f32 elementwise

    # GCN layer 2: ReLU( A_hat @ (H1 @ W2) + b2 )
    hw = jnp.dot(h1.astype(jnp.bfloat16), w2, preferred_element_type=jnp.float32)
    h2 = jnp.dot(a, hw, preferred_element_type=jnp.float32) + b2
    h2 = jnp.maximum(h2, 0.0)

    # global_mean_pool as f32 [G_pad, N_pad] @ [N_pad, 128]
    pooled = jnp.dot(pool_ref[...], h2, preferred_element_type=jnp.float32)

    # fused value+policy head: one [G_pad,128] @ [128,head_pad] matmul
    heads = jnp.dot(pooled.astype(jnp.bfloat16), wh,
                    preferred_element_type=jnp.float32) + bh

    # column 0 -> value (tanh); columns 1..num_actions -> policy (softmax);
    # remaining padded columns masked out of the softmax.
    col = jax.lax.broadcasted_iota(jnp.int32, heads.shape, 1)
    is_policy = (col >= 1) & (col <= num_actions)
    logits = jnp.where(is_policy, heads, -1e30)
    logits = logits - jnp.max(logits, axis=-1, keepdims=True)
    e = jnp.exp(logits)                                # masked cols -> exactly 0
    # exact reciprocal (driver checks sum(p) ~ 1 within 1e-5)
    probs = e * pl.reciprocal(jnp.sum(e, axis=-1, keepdims=True), approx=False)

    out_ref[...] = jnp.where(col == 0, jnp.tanh(heads), probs)


def _round_up(v, m):
    return ((v + m - 1) // m) * m


def build_norm_adj_padded(edge_index, n, n_pad):
    """Dense D^{-1/2}(A+I)D^{-1/2}, built directly at padded size (f32).

    Padded rows/cols get zero adjacency and no self loop, so they never
    contribute to real nodes."""
    src, dst = edge_index[0], edge_index[1]
    a = jnp.zeros((n_pad, n_pad), jnp.float32)
    a = a.at[dst, src].add(1.0)                        # rows = aggregation targets
    self_loop = (jnp.arange(n_pad) < n).astype(jnp.float32)
    a = a + jnp.diag(self_loop)                        # self loops on real nodes only
    deg = jnp.sum(a, axis=1)
    dinv = jnp.where(deg > 0.0, jax.lax.rsqrt(jnp.maximum(deg, 1e-12)), 0.0)
    return a * dinv[:, None] * dinv[None, :]


def build_pool_matrix_padded(batch, n, g_pad, n_pad):
    """[G_pad, N_pad] f32 matrix performing global_mean_pool (padding rows/cols
    have zero weight)."""
    batch_pad = jnp.full((n_pad,), -1, jnp.int32).at[:n].set(batch)
    onehot = (batch_pad[None, :] == jnp.arange(g_pad, dtype=jnp.int32)[:, None])
    onehot = onehot.astype(jnp.float32)
    counts = jnp.maximum(jnp.sum(onehot, axis=1, keepdims=True), 1.0)
    return onehot / counts


def hive_gnn_forward(x, edge_index, batch, params, num_graphs, num_actions):
    # Mirror PyTorch `if edge_index.size(0) > 0` literally: for a [2, E] tensor
    # size(0) == 2 even when E == 0, so the zeros(1,128) head-only path only
    # triggers on a genuinely 0-row edge_index; [2, 0] falls through to the
    # self-loop-only GCN, matching PyG semantics.
    if edge_index.shape[0] == 0:
        pooled = jnp.zeros((1, HIDDEN), jnp.float32)
        v = jnp.tanh(pooled @ params["wv"] + params["bv"])
        p = jax.nn.softmax(pooled @ params["wp"] + params["bp"], axis=-1)
        return v, p

    n, f = x.shape
    n_pad = _round_up(n, 128)                   # lane-dense A_hat / pool columns
    g_pad = _round_up(num_graphs, 8)
    f_pad = _round_up(f, 128)                   # lane-dense X tile
    head_pad = _round_up(1 + num_actions, 128)  # lane-dense fused head output

    # Graph prep (dense scatter + padding) fuses under jit of this function.
    a_hat = build_norm_adj_padded(edge_index, n, n_pad)           # f32
    pool = build_pool_matrix_padded(batch, n, g_pad, n_pad)       # f32
    x_pad = jnp.zeros((n_pad, f_pad), jnp.bfloat16).at[:n, :f].set(
        x.astype(jnp.bfloat16))

    # Packed weight slab: [f_pad + 2*128, head_pad] bf16
    #   rows [0:f_pad)              -> W1  (padded feature rows are zero)
    #   rows [f_pad:f_pad+128)      -> W2
    #   rows [f_pad+128:f_pad+256)  -> fused head (col 0 = value, 1.. = policy)
    w_slab = jnp.zeros((f_pad + 2 * HIDDEN, head_pad), jnp.float32)
    w_slab = w_slab.at[:f, 0:HIDDEN].set(params["w1"])
    w_slab = w_slab.at[f_pad:f_pad + HIDDEN, 0:HIDDEN].set(params["w2"])
    w_slab = w_slab.at[f_pad + HIDDEN:, 0:1].set(params["wv"])
    w_slab = w_slab.at[f_pad + HIDDEN:, 1:1 + num_actions].set(params["wp"])
    w_slab = w_slab.astype(jnp.bfloat16)

    # Packed bias slab: [8, head_pad] f32 (row 0 = b1, row 1 = b2, row 2 = bh)
    b_slab = jnp.zeros((8, head_pad), jnp.float32)
    b_slab = b_slab.at[0:1, 0:HIDDEN].set(params["b1"])
    b_slab = b_slab.at[1:2, 0:HIDDEN].set(params["b2"])
    b_slab = b_slab.at[2:3, 0:1].set(params["bv"])
    b_slab = b_slab.at[2:3, 1:1 + num_actions].set(params["bp"])

    vmem = pl.BlockSpec(memory_space=pltpu.MemorySpace.VMEM)
    out = pl.pallas_call(
        functools.partial(hive_gnn_kernel, num_actions=num_actions, f_pad=f_pad),
        out_shape=jax.ShapeDtypeStruct((g_pad, head_pad), jnp.float32),
        in_specs=[vmem] * 5,
        out_specs=vmem,
        compiler_params=pltpu.CompilerParams(vmem_limit_bytes=32 * 1024 * 1024),
    )(a_hat, x_pad, w_slab, b_slab, pool)

    v = out[:num_graphs, 0:1]
    p = out[:num_graphs, 1:1 + num_actions]
    return v, p


def init_params(key, node_features, hidden, num_actions):
    ks = jax.random.split(key, 8)
    scale = 0.1
    return {
        "w1": scale * jax.random.normal(ks[0], (node_features, hidden), jnp.float32),
        "b1": scale * jax.random.normal(ks[1], (1, hidden), jnp.float32),
        "w2": scale * jax.random.normal(ks[2], (hidden, hidden), jnp.float32),
        "b2": scale * jax.random.normal(ks[3], (1, hidden), jnp.float32),
        "wv": scale * jax.random.normal(ks[4], (hidden, 1), jnp.float32),
        "bv": scale * jax.random.normal(ks[5], (1, 1), jnp.float32),
        "wp": scale * jax.random.normal(ks[6], (hidden, num_actions), jnp.float32),
        "bp": scale * jax.random.normal(ks[7], (1, num_actions), jnp.float32),
    }


if __name__ == "__main__":
    node_features = 16
    num_actions = 32
    num_boards = 32          # batch many boards into ONE kernel call (review #1)
    nodes_per_board = 8
    num_nodes = num_boards * nodes_per_board   # 256 -> N_pad = 256

    key = jax.random.PRNGKey(0)
    kx, kp = jax.random.split(key)

    # node features [N, F]
    x = jax.random.normal(kx, (num_nodes, node_features), jnp.float32)

    # per-board chain graph 0-1-...-7 (both directions), block-diagonal overall:
    # all boards are batched into one kernel call.
    s = jnp.arange(nodes_per_board - 1, dtype=jnp.int32)
    offs = (jnp.arange(num_boards, dtype=jnp.int32) * nodes_per_board)[:, None]
    fwd_src = (offs + s[None, :]).reshape(-1)
    fwd_dst = (offs + s[None, :] + 1).reshape(-1)
    src = jnp.concatenate([fwd_src, fwd_dst])
    dst = jnp.concatenate([fwd_dst, fwd_src])
    edge_index = jnp.stack([src, dst], axis=0)                     # [2, E]

    batch = jnp.repeat(jnp.arange(num_boards, dtype=jnp.int32),
                       nodes_per_board)                            # node -> graph id

    params = init_params(kp, node_features, HIDDEN, num_actions)

    # jit the whole forward so A_hat/pool construction + padding fuse and stay
    # off the per-call critical path.
    forward = jax.jit(hive_gnn_forward,
                      static_argnames=("num_graphs", "num_actions"))
    v, p = forward(x, edge_index, batch, params,
                   num_graphs=num_boards, num_actions=num_actions)
    jax.block_until_ready((v, p))

    assert v.shape == (num_boards, 1)
    assert p.shape == (num_boards, num_actions)
    assert bool(jnp.all(jnp.isfinite(v))) and bool(jnp.all(jnp.isfinite(p)))
    assert bool(jnp.allclose(jnp.sum(p, axis=-1), 1.0, atol=1e-5))
    assert bool(jnp.all(jnp.abs(v) <= 1.0)) and bool(jnp.all(p >= 0.0))
    print("KERNEL_OK")
</pallas_src>

<mosaic_0001>
module attributes {stable_mosaic.version = 11 : i64} {
  func.func private @main(%arg0: i32) attributes {dimension_semantics = [#tpu.dimension_semantics<core_parallel>], iteration_bounds = array<i64: 2>, tpu.core_type = #tpu.core_type<sc_scalar_subcore>, window_params = []} {
    return
  }
}

module attributes {stable_mosaic.version = 11 : i64} {
  func.func private @main(%arg0: i32) attributes {dimension_semantics = [#tpu.dimension_semantics<core_parallel>], iteration_bounds = array<i64: 2>, tpu.core_type = #tpu.core_type<sc_scalar_subcore>, window_params = []} {
    return
  }
}

module attributes {stable_mosaic.version = 11 : i64} {
  func.func @hive_gnn_kernel(%arg0: memref<256x256xf32, #tpu.memory_space<vmem>>, %arg1: memref<256x128xbf16, #tpu.memory_space<vmem>>, %arg2: memref<384x128xbf16, #tpu.memory_space<vmem>>, %arg3: memref<8x128xf32, #tpu.memory_space<vmem>>, %arg4: memref<32x256xf32, #tpu.memory_space<vmem>>, %arg5: memref<32x128xf32, #tpu.memory_space<vmem>>) attributes {dimension_semantics = [], scalar_prefetch = 0 : i64, scratch_operands = 0 : i64, tpu.core_type = #tpu.core_type<tc>} {
    %c0 = arith.constant 0 : index
    %c0_0 = arith.constant 0 : index
    %0 = vector.load %arg0[%c0, %c0_0] : memref<256x256xf32, #tpu.memory_space<vmem>>, vector<256x256xf32>
    %c0_1 = arith.constant 0 : index
    %c0_2 = arith.constant 0 : index
    %1 = vector.load %arg2[%c0_1, %c0_2] : memref<384x128xbf16, #tpu.memory_space<vmem>>, vector<128x128xbf16>
    %c128 = arith.constant 128 : index
    %c0_3 = arith.constant 0 : index
    %2 = vector.load %arg2[%c128, %c0_3] : memref<384x128xbf16, #tpu.memory_space<vmem>>, vector<128x128xbf16>
    %c256 = arith.constant 256 : index
    %c0_4 = arith.constant 0 : index
    %3 = vector.load %arg2[%c256, %c0_4] : memref<384x128xbf16, #tpu.memory_space<vmem>>, vector<128x128xbf16>
    %c0_5 = arith.constant 0 : index
    %c0_6 = arith.constant 0 : index
    %4 = vector.load %arg3[%c0_5, %c0_6] : memref<8x128xf32, #tpu.memory_space<vmem>>, vector<1x128xf32>
    %c1 = arith.constant 1 : index
    %c0_7 = arith.constant 0 : index
    %5 = vector.load %arg3[%c1, %c0_7] : memref<8x128xf32, #tpu.memory_space<vmem>>, vector<1x128xf32>
    %c2 = arith.constant 2 : index
    %c0_8 = arith.constant 0 : index
    %6 = vector.load %arg3[%c2, %c0_8] : memref<8x128xf32, #tpu.memory_space<vmem>>, vector<1x128xf32>
    %c0_9 = arith.constant 0 : index
    %c0_10 = arith.constant 0 : index
    %7 = vector.load %arg1[%c0_9, %c0_10] : memref<256x128xbf16, #tpu.memory_space<vmem>>, vector<256x128xbf16>
    %cst = arith.constant dense<0.000000e+00> : vector<256x128xf32>
    %8 = tpu.matmul %7, %1, %cst {dimension_numbers = #tpu.dot_dimension_numbers<[1], [0], [0], [1], [0, 0, 1, 1], [], []>} : vector<256x128xbf16>, vector<128x128xbf16>, vector<256x128xf32> -> vector<256x128xf32>
    %cst_11 = arith.constant dense<0.000000e+00> : vector<256x128xf32>
    %9 = tpu.matmul %0, %8, %cst_11 {dimension_numbers = #tpu.dot_dimension_numbers<[1], [0], [0], [1], [0, 0, 1, 1], [], []>} : vector<256x256xf32>, vector<256x128xf32>, vector<256x128xf32> -> vector<256x128xf32>
    %10 = vector.broadcast %4 : vector<1x128xf32> to vector<256x128xf32>
    %11 = arith.addf %9, %10 : vector<256x128xf32>
    %cst_12 = arith.constant 0.000000e+00 : f32
    %12 = vector.broadcast %cst_12 : f32 to vector<256x128xf32>
    %13 = arith.maximumf %11, %12 : vector<256x128xf32>
    %14 = arith.truncf %13 : vector<256x128xf32> to vector<256x128xbf16>
    %cst_13 = arith.constant dense<0.000000e+00> : vector<256x128xf32>
    %15 = tpu.matmul %14, %2, %cst_13 {dimension_numbers = #tpu.dot_dimension_numbers<[1], [0], [0], [1], [0, 0, 1, 1], [], []>} : vector<256x128xbf16>, vector<128x128xbf16>, vector<256x128xf32> -> vector<256x128xf32>
    %cst_14 = arith.constant dense<0.000000e+00> : vector<256x128xf32>
    %16 = tpu.matmul %0, %15, %cst_14 {dimension_numbers = #tpu.dot_dimension_numbers<[1], [0], [0], [1], [0, 0, 1, 1], [], []>} : vector<256x256xf32>, vector<256x128xf32>, vector<256x128xf32> -> vector<256x128xf32>
    %17 = vector.broadcast %5 : vector<1x128xf32> to vector<256x128xf32>
    %18 = arith.addf %16, %17 : vector<256x128xf32>
    %cst_15 = arith.constant 0.000000e+00 : f32
    %19 = vector.broadcast %cst_15 : f32 to vector<256x128xf32>
    %20 = arith.maximumf %18, %19 : vector<256x128xf32>
    %c0_16 = arith.constant 0 : index
    %c0_17 = arith.constant 0 : index
    %21 = vector.load %arg4[%c0_16, %c0_17] : memref<32x256xf32, #tpu.memory_space<vmem>>, vector<32x256xf32>
    %cst_18 = arith.constant dense<0.000000e+00> : vector<32x128xf32>
    %22 = tpu.matmul %21, %20, %cst_18 {dimension_numbers = #tpu.dot_dimension_numbers<[1], [0], [0], [1], [0, 0, 1, 1], [], []>} : vector<32x256xf32>, vector<256x128xf32>, vector<32x128xf32> -> vector<32x128xf32>
    %23 = arith.truncf %22 : vector<32x128xf32> to vector<32x128xbf16>
    %cst_19 = arith.constant dense<0.000000e+00> : vector<32x128xf32>
    %24 = tpu.matmul %23, %3, %cst_19 {dimension_numbers = #tpu.dot_dimension_numbers<[1], [0], [0], [1], [0, 0, 1, 1], [], []>} : vector<32x128xbf16>, vector<128x128xbf16>, vector<32x128xf32> -> vector<32x128xf32>
    %25 = vector.broadcast %6 : vector<1x128xf32> to vector<32x128xf32>
    %26 = arith.addf %24, %25 : vector<32x128xf32>
    %27 = tpu.iota {dimensions = array<i32: 1>} : vector<32x128xi32>
    %c1_i32 = arith.constant 1 : i32
    %28 = vector.broadcast %c1_i32 : i32 to vector<32x128xi32>
    %29 = arith.cmpi sge, %27, %28 : vector<32x128xi32>
    %c32_i32 = arith.constant 32 : i32
    %30 = vector.broadcast %c32_i32 : i32 to vector<32x128xi32>
    %31 = arith.cmpi sle, %27, %30 : vector<32x128xi32>
    %32 = arith.andi %29, %31 : vector<32x128xi1>
    %cst_20 = arith.constant -1.000000e+30 : f32
    %33 = vector.broadcast %cst_20 : f32 to vector<32x128xf32>
    %34 = arith.select %32, %26, %33 : vector<32x128xi1>, vector<32x128xf32>
    %cst_21 = arith.constant dense<0xFF800000> : vector<32xf32>
    %35 = vector.multi_reduction <maximumf>, %34, %cst_21 [1] : vector<32x128xf32> to vector<32xf32>
    %36 = vector.shape_cast %35 : vector<32xf32> to vector<32x1xf32>
    %37 = vector.broadcast %36 : vector<32x1xf32> to vector<32x128xf32>
    %38 = arith.subf %34, %37 : vector<32x128xf32>
    %39 = math.exp %38 : vector<32x128xf32>
    %cst_22 = arith.constant dense<0.000000e+00> : vector<32xf32>
    %40 = vector.multi_reduction <add>, %39, %cst_22 [1] : vector<32x128xf32> to vector<32xf32>
    %41 = vector.shape_cast %40 : vector<32xf32> to vector<32x1xf32>
    %42 = tpu.reciprocal %41 : vector<32x1xf32> -> vector<32x1xf32>
    %43 = vector.broadcast %42 : vector<32x1xf32> to vector<32x128xf32>
    %44 = arith.mulf %39, %43 : vector<32x128xf32>
    %c0_i32 = arith.constant 0 : i32
    %45 = vector.broadcast %c0_i32 : i32 to vector<32x128xi32>
    %46 = arith.cmpi eq, %27, %45 : vector<32x128xi32>
    %47 = math.tanh %26 : vector<32x128xf32>
    %48 = arith.select %46, %47, %44 : vector<32x128xi1>, vector<32x128xf32>
    %c0_23 = arith.constant 0 : index
    %c0_24 = arith.constant 0 : index
    %49 = vector.load %arg5[%c0_23, %c0_24] : memref<32x128xf32, #tpu.memory_space<vmem>>, vector<32x128xf32>
    tpu.vector_store %arg5[%c0_23, %c0_24], %48 {strides = array<i32>} : memref<32x128xf32, #tpu.memory_space<vmem>>, vector<32x128xf32>,
    return
  }
}

</mosaic_0001>

<llo_original>
// kernel: hive_gnn_forward.1
$region0: #{hive_gnn_forward.1}
  #allocation0 [shape = 'u32[]', space=smem, size = 0x4, offset = 0x4, fixed_abs, tag = 'smem constant byte address 0x4 - core index']
  #allocation1 [shape = 'u32[144,128]{1,0:T(1,128)}', space=vmem, size = 0x12000, scoped, tag = 'internal scratch']
  %s0 = inlined_call_operand.vmem [shape: f32[256,256], index: 0, kind: input, shape index: {}]
  %s1 = inlined_call_operand.vmem [shape: bf16[256,128], index: 1, kind: input, shape index: {}]
  %s2 = inlined_call_operand.vmem [shape: bf16[384,128], index: 2, kind: input, shape index: {}]
  %s3 = inlined_call_operand.vmem [shape: f32[8,128], index: 3, kind: input, shape index: {}]
  %s4 = inlined_call_operand.vmem [shape: f32[32,256], index: 4, kind: input, shape index: {}]
  %s5 = inlined_call_operand.vmem [shape: f32[32,128], index: 5, kind: output, shape index: {}]
  %s6 = sld [smem:[#allocation0]]
  $region30: #{hive_gnn_forward.1} parent=0
    _
  %s8 = ssub.s32 1, %s6
  %s9 = scalar_select 0, %s8, %s6
  // Predicated region
  $region2: #{hive_gnn_forward.1} parent=0 // pred_check
    _
  $region3: #{hive_gnn_forward.1} parent=0 // pred_check_branch
    %11 = sbr.rel (0) target = $region5
  $region4: #{hive_gnn_forward.1} parent=0 // pred_region
    _
  $region5: #{hive_gnn_forward.1} parent=0 // pred_fallthru
    _
  // Predicated region
  $region6: #{hive_gnn_forward.1} parent=0 // pred_check
    _
  $region7: #{hive_gnn_forward.1} parent=0 // pred_check_branch
    %13 = sbr.rel (0) target = $region9
  $region8: #{hive_gnn_forward.1} parent=0 // pred_region
    _
  $region9: #{hive_gnn_forward.1} parent=0 // pred_fallthru
    _
  // Predicated region
  $region10: #{hive_gnn_forward.1} parent=0 // pred_check
    _
  $region11: #{hive_gnn_forward.1} parent=0 // pred_check_branch
    %15 = sbr.rel (0) target = $region13
  $region12: #{hive_gnn_forward.1} parent=0 // pred_region
    _
  $region13: #{hive_gnn_forward.1} parent=0 // pred_fallthru
    _
  // Predicated region
  $region14: #{hive_gnn_forward.1} parent=0 // pred_check
    _
  $region15: #{hive_gnn_forward.1} parent=0 // pred_check_branch
    %17 = sbr.rel (0) target = $region17
  $region16: #{hive_gnn_forward.1} parent=0 // pred_region
    _
  $region17: #{hive_gnn_forward.1} parent=0 // pred_fallthru
    _
  // Predicated region
  $region18: #{hive_gnn_forward.1} parent=0 // pred_check
    _
  $region19: #{hive_gnn_forward.1} parent=0 // pred_check_branch
    %19 = sbr.rel (0) target = $region21
  $region20: #{hive_gnn_forward.1} parent=0 // pred_region
    _
  $region21: #{hive_gnn_forward.1} parent=0 // pred_fallthru
    _
  %v21 = vld [vmem:[%s0] sm:$0xff]
  %v22 = vld [vmem:[%s0 + $0x8] sm:$0xff]
  %v23 = vld [vmem:[%s0 + $0x10] sm:$0xff]
  %v24 = vld [vmem:[%s0 + $0x18] sm:$0xff]
  %v25 = vld [vmem:[%s0 + $0x20] sm:$0xff]
  %v26 = vld [vmem:[%s0 + $0x28] sm:$0xff]
  %v27 = vld [vmem:[%s0 + $0x30] sm:$0xff]
  %v28 = vld [vmem:[%s0 + $0x38] sm:$0xff]
  %v29 = vld [vmem:[%s0 + $0x40] sm:$0xff]
  %v30 = vld [vmem:[%s0 + $0x48] sm:$0xff]
  %v31 = vld [vmem:[%s0 + $0x50] sm:$0xff]
  %v32 = vld [vmem:[%s0 + $0x58] sm:$0xff]
  %v33 = vld [vmem:[%s0 + $0x60] sm:$0xff]
  %v34 = vld [vmem:[%s0 + $0x68] sm:$0xff]
  %v35 = vld [vmem:[%s0 + $0x70] sm:$0xff]
  %v36 = vld [vmem:[%s0 + $0x78] sm:$0xff]
  %v37 = vld [vmem:[%s0 + $0x80] sm:$0xff]
  %v38 = vld [vmem:[%s0 + $0x88] sm:$0xff]
  %v39 = vld [vmem:[%s0 + $0x90] sm:$0xff]
  %v40 = vld [vmem:[%s0 + $0x98] sm:$0xff]
  %v41 = vld [vmem:[%s0 + $0xa0] sm:$0xff]
  %v42 = vld [vmem:[%s0 + $0xa8] sm:$0xff]
  %v43 = vld [vmem:[%s0 + $0xb0] sm:$0xff]
  %v44 = vld [vmem:[%s0 + $0xb8] sm:$0xff]
  %v45 = vld [vmem:[%s0 + $0xc0] sm:$0xff]
  %v46 = vld [vmem:[%s0 + $0xc8] sm:$0xff]
  %v47 = vld [vmem:[%s0 + $0xd0] sm:$0xff]
  %v48 = vld [vmem:[%s0 + $0xd8] sm:$0xff]
  %v49 = vld [vmem:[%s0 + $0xe0] sm:$0xff]
  %v50 = vld [vmem:[%s0 + $0xe8] sm:$0xff]
  %v51 = vld [vmem:[%s0 + $0xf0] sm:$0xff]
  %v52 = vld [vmem:[%s0 + $0xf8] sm:$0xff]
  %v53 = vld [vmem:[%s0 + $0x100] sm:$0xff]
  %v54 = vld [vmem:[%s0 + $0x108] sm:$0xff]
  %v55 = vld [vmem:[%s0 + $0x110] sm:$0xff]
  %v56 = vld [vmem:[%s0 + $0x118] sm:$0xff]
  %v57 = vld [vmem:[%s0 + $0x120] sm:$0xff]
  %v58 = vld [vmem:[%s0 + $0x128] sm:$0xff]
  %v59 = vld [vmem:[%s0 + $0x130] sm:$0xff]
  %v60 = vld [vmem:[%s0 + $0x138] sm:$0xff]
  %v61 = vld [vmem:[%s0 + $0x140] sm:$0xff]
  %v62 = vld [vmem:[%s0 + $0x148] sm:$0xff]
  %v63 = vld [vmem:[%s0 + $0x150] sm:$0xff]
  %v64 = vld [vmem:[%s0 + $0x158] sm:$0xff]
  %v65 = vld [vmem:[%s0 + $0x160] sm:$0xff]
  %v66 = vld [vmem:[%s0 + $0x168] sm:$0xff]
  %v67 = vld [vmem:[%s0 + $0x170] sm:$0xff]
  %v68 = vld [vmem:[%s0 + $0x178] sm:$0xff]
  %v69 = vld [vmem:[%s0 + $0x180] sm:$0xff]
  %v70 = vld [vmem:[%s0 + $0x188] sm:$0xff]
  %v71 = vld [vmem:[%s0 + $0x190] sm:$0xff]
  %v72 = vld [vmem:[%s0 + $0x198] sm:$0xff]
  %v73 = vld [vmem:[%s0 + $0x1a0] sm:$0xff]
  %v74 = vld [vmem:[%s0 + $0x1a8] sm:$0xff]
  %v75 = vld [vmem:[%s0 + $0x1b0] sm:$0xff]
  %v76 = vld [vmem:[%s0 + $0x1b8] sm:$0xff]
  %v77 = vld [vmem:[%s0 + $0x1c0] sm:$0xff]
  %v78 = vld [vmem:[%s0 + $0x1c8] sm:$0xff]
  %v79 = vld [vmem:[%s0 + $0x1d0] sm:$0xff]
  %v80 = vld [vmem:[%s0 + $0x1d8] sm:$0xff]
  %v81 = vld [vmem:[%s0 + $0x1e0] sm:$0xff]
  %v82 = vld [vmem:[%s0 + $0x1e8] sm:$0xff]
  %v83 = vld [vmem:[%s0 + $0x1f0] sm:$0xff]
  %v84 = vld [vmem:[%s0 + $0x1f8] sm:$0xff]
  %v85 = vld [vmem:[%s2] sm:$0xf]
  %v86 = vld [vmem:[%s2 + $0x4] sm:$0xf]
  %v87 = vld [vmem:[%s2 + $0x8] sm:$0xf]
  %v88 = vld [vmem:[%s2 + $0xc] sm:$0xf]
  %v89 = vld [vmem:[%s2 + $0x10] sm:$0xf]
  %v90 = vld [vmem:[%s2 + $0x14] sm:$0xf]
  %v91 = vld [vmem:[%s2 + $0x18] sm:$0xf]
  %v92 = vld [vmem:[%s2 + $0x1c] sm:$0xf]
  %v93 = vld [vmem:[%s2 + $0x20] sm:$0xf]
  %v94 = vld [vmem:[%s2 + $0x24] sm:$0xf]
  %v95 = vld [vmem:[%s2 + $0x28] sm:$0xf]
  %v96 = vld [vmem:[%s2 + $0x2c] sm:$0xf]
  %v97 = vld [vmem:[%s2 + $0x30] sm:$0xf]
  %v98 = vld [vmem:[%s2 + $0x34] sm:$0xf]
  %v99 = vld [vmem:[%s2 + $0x38] sm:$0xf]
  %v100 = vld [vmem:[%s2 + $0x3c] sm:$0xf]
  %v101 = vld [vmem:[%s2 + $0x40] sm:$0xf]
  %v102 = vld [vmem:[%s2 + $0x44] sm:$0xf]
  %v103 = vld [vmem:[%s2 + $0x48] sm:$0xf]
  %v104 = vld [vmem:[%s2 + $0x4c] sm:$0xf]
  %v105 = vld [vmem:[%s2 + $0x50] sm:$0xf]
  %v106 = vld [vmem:[%s2 + $0x54] sm:$0xf]
  %v107 = vld [vmem:[%s2 + $0x58] sm:$0xf]
  %v108 = vld [vmem:[%s2 + $0x5c] sm:$0xf]
  %v109 = vld [vmem:[%s2 + $0x60] sm:$0xf]
  %v110 = vld [vmem:[%s2 + $0x64] sm:$0xf]
  %v111 = vld [vmem:[%s2 + $0x68] sm:$0xf]
  %v112 = vld [vmem:[%s2 + $0x6c] sm:$0xf]
  %v113 = vld [vmem:[%s2 + $0x70] sm:$0xf]
  %v114 = vld [vmem:[%s2 + $0x74] sm:$0xf]
  %v115 = vld [vmem:[%s2 + $0x78] sm:$0xf]
  %v116 = vld [vmem:[%s2 + $0x7c] sm:$0xf]
  %v117 = vld [vmem:[%s2 + $0x80] sm:$0xf]
  %v118 = vld [vmem:[%s2 + $0x84] sm:$0xf]
  %v119 = vld [vmem:[%s2 + $0x88] sm:$0xf]
  %v120 = vld [vmem:[%s2 + $0x8c] sm:$0xf]
  %v121 = vld [vmem:[%s2 + $0x90] sm:$0xf]
  %v122 = vld [vmem:[%s2 + $0x94] sm:$0xf]
  %v123 = vld [vmem:[%s2 + $0x98] sm:$0xf]
  %v124 = vld [vmem:[%s2 + $0x9c] sm:$0xf]
  %v125 = vld [vmem:[%s2 + $0xa0] sm:$0xf]
  %v126 = vld [vmem:[%s2 + $0xa4] sm:$0xf]
  %v127 = vld [vmem:[%s2 + $0xa8] sm:$0xf]
  %v128 = vld [vmem:[%s2 + $0xac] sm:$0xf]
  %v129 = vld [vmem:[%s2 + $0xb0] sm:$0xf]
  %v130 = vld [vmem:[%s2 + $0xb4] sm:$0xf]
  %v131 = vld [vmem:[%s2 + $0xb8] sm:$0xf]
  %v132 = vld [vmem:[%s2 + $0xbc] sm:$0xf]
  %v133 = vld [vmem:[%s3] sm:$0x1]
  %v134 = vld [vmem:[%s3 + $0x1] sm:$0x1]
  %v135 = vld [vmem:[%s3 + $0x2] sm:$0x1]
  %v136 = vld [vmem:[%s1] sm:$0xf]
  %v137 = vld [vmem:[%s1 + $0x4] sm:$0xf]
  %v138 = vld [vmem:[%s1 + $0x8] sm:$0xf]
  %v139 = vld [vmem:[%s1 + $0xc] sm:$0xf]
  %v140 = vld [vmem:[%s1 + $0x10] sm:$0xf]
  %v141 = vld [vmem:[%s1 + $0x14] sm:$0xf]
  %v142 = vld [vmem:[%s1 + $0x18] sm:$0xf]
  %v143 = vld [vmem:[%s1 + $0x1c] sm:$0xf]
  %v144 = vld [vmem:[%s1 + $0x20] sm:$0xf]
  %v145 = vld [vmem:[%s1 + $0x24] sm:$0xf]
  %v146 = vld [vmem:[%s1 + $0x28] sm:$0xf]
  %v147 = vld [vmem:[%s1 + $0x2c] sm:$0xf]
  %v148 = vld [vmem:[%s1 + $0x30] sm:$0xf]
  %v149 = vld [vmem:[%s1 + $0x34] sm:$0xf]
  %v150 = vld [vmem:[%s1 + $0x38] sm:$0xf]
  %v151 = vld [vmem:[%s1 + $0x3c] sm:$0xf]
  %v152 = vld [vmem:[%s1 + $0x40] sm:$0xf]
  %v153 = vld [vmem:[%s1 + $0x44] sm:$0xf]
  %v154 = vld [vmem:[%s1 + $0x48] sm:$0xf]
  %v155 = vld [vmem:[%s1 + $0x4c] sm:$0xf]
  %v156 = vld [vmem:[%s1 + $0x50] sm:$0xf]
  %v157 = vld [vmem:[%s1 + $0x54] sm:$0xf]
  %v158 = vld [vmem:[%s1 + $0x58] sm:$0xf]
  %v159 = vld [vmem:[%s1 + $0x5c] sm:$0xf]
  %v160 = vld [vmem:[%s1 + $0x60] sm:$0xf]
  %v161 = vld [vmem:[%s1 + $0x64] sm:$0xf]
  %v162 = vld [vmem:[%s1 + $0x68] sm:$0xf]
  %v163 = vld [vmem:[%s1 + $0x6c] sm:$0xf]
  %v164 = vld [vmem:[%s1 + $0x70] sm:$0xf]
  %v165 = vld [vmem:[%s1 + $0x74] sm:$0xf]
  %v166 = vld [vmem:[%s1 + $0x78] sm:$0xf]
  %v167 = vld [vmem:[%s1 + $0x7c] sm:$0xf]
  %v200 = vunpack.c.l.b16 %v136
  %v201 = vunpack.c.l.b16 %v137
  %v202 = vunpack.c.l.b16 %v138
  %v203 = vunpack.c.l.b16 %v139
  %v204 = vunpack.c.l.b16 %v140
  %v205 = vunpack.c.l.b16 %v141
  %v206 = vunpack.c.l.b16 %v142
  %v207 = vunpack.c.l.b16 %v143
  %v208 = vunpack.c.l.b16 %v144
  %v209 = vunpack.c.l.b16 %v145
  %v210 = vunpack.c.l.b16 %v146
  %v211 = vunpack.c.l.b16 %v147
  %v212 = vunpack.c.l.b16 %v148
  %v213 = vunpack.c.l.b16 %v149
  %v214 = vunpack.c.l.b16 %v150
  %v215 = vunpack.c.l.b16 %v151
  %v216 = vunpack.c.l.b16 %v152
  %v217 = vunpack.c.l.b16 %v153
  %v218 = vunpack.c.l.b16 %v154
  %v219 = vunpack.c.l.b16 %v155
  %v220 = vunpack.c.l.b16 %v156
  %v221 = vunpack.c.l.b16 %v157
  %v222 = vunpack.c.l.b16 %v158
  %v223 = vunpack.c.l.b16 %v159
  %v224 = vunpack.c.l.b16 %v160
  %v225 = vunpack.c.l.b16 %v161
  %v226 = vunpack.c.l.b16 %v162
  %v227 = vunpack.c.l.b16 %v163
  %v228 = vunpack.c.l.b16 %v164
  %v229 = vunpack.c.l.b16 %v165
  %v230 = vunpack.c.l.b16 %v166
  %v231 = vunpack.c.l.b16 %v167
  %v232 = vpack.c.b16 %v201, %v200
  %v233 = vpack.c.b16 %v203, %v202
  %v234 = vpack.c.b16 %v205, %v204
  %v235 = vpack.c.b16 %v207, %v206
  %v236 = vpack.c.b16 %v209, %v208
  %v237 = vpack.c.b16 %v211, %v210
  %v238 = vpack.c.b16 %v213, %v212
  %v239 = vpack.c.b16 %v215, %v214
  %v240 = vpack.c.b16 %v217, %v216
  %v241 = vpack.c.b16 %v219, %v218
  %v242 = vpack.c.b16 %v221, %v220
  %v243 = vpack.c.b16 %v223, %v222
  %v244 = vpack.c.b16 %v225, %v224
  %v245 = vpack.c.b16 %v227, %v226
  %v246 = vpack.c.b16 %v229, %v228
  %v247 = vpack.c.b16 %v231, %v230
  %v280 = vunpack.c.l.b16 %v85
  %v281 = vunpack.c.l.b16 %v86
  %v282 = vunpack.c.l.b16 %v87
  %v283 = vunpack.c.l.b16 %v88
  %v284 = vunpack.c.l.b16 %v89
  %v285 = vunpack.c.l.b16 %v90
  %v286 = vunpack.c.l.b16 %v91
  %v287 = vunpack.c.l.b16 %v92
  %v288 = vunpack.c.l.b16 %v93
  %v289 = vunpack.c.l.b16 %v94
  %v290 = vunpack.c.l.b16 %v95
  %v291 = vunpack.c.l.b16 %v96
  %v292 = vunpack.c.l.b16 %v97
  %v293 = vunpack.c.l.b16 %v98
  %v294 = vunpack.c.l.b16 %v99
  %v295 = vunpack.c.l.b16 %v100
  %v296 = vpack.c.b16 %v281, %v280
  %v297 = vpack.c.b16 %v283, %v282
  %v298 = vpack.c.b16 %v285, %v284
  %v299 = vpack.c.b16 %v287, %v286
  %v300 = vpack.c.b16 %v289, %v288
  %v301 = vpack.c.b16 %v291, %v290
  %v302 = vpack.c.b16 %v293, %v292
  %v303 = vpack.c.b16 %v295, %v294
  %312 = vmatprep.subr.bf16.mxu0 0
  %313 = vmatpush1.bf16.msra.mxu0 %v296
  %314 = vmatprep.subr.bf16.mxu0 0
  %315 = vmatpush1.bf16.msra.mxu0 %v297
  %316 = vmatprep.subr.bf16.mxu0 0
  %317 = vmatpush1.bf16.msra.mxu0 %v298
  %318 = vmatprep.subr.bf16.mxu0 0
  %319 = vmatpush1.bf16.msra.mxu0 %v299
  %320 = vmatprep.subr.bf16.mxu0 0
  %321 = vmatpush1.bf16.msra.mxu0 %v300
  %322 = vmatprep.subr.bf16.mxu0 0
  %323 = vmatpush1.bf16.msra.mxu0 %v301
  %324 = vmatprep.subr.bf16.mxu0 0
  %325 = vmatpush1.bf16.msra.mxu0 %v302
  %326 = vmatprep.subr.bf16.mxu0 0
  %327 = vmatpush1.bf16.msra.mxu0 %v303
  %328 = vmatprep.subr.bf16.mxu0 0
  %329 = vmatpush1.bf16.msra.mxu0 0
  %330 = vmatprep.subr.bf16.mxu0 0
  %331 = vmatpush1.bf16.msra.mxu0 0
  %332 = vmatprep.subr.bf16.mxu0 0
  %333 = vmatpush1.bf16.msra.mxu0 0
  %334 = vmatprep.subr.bf16.mxu0 0
  %335 = vmatpush1.bf16.msra.mxu0 0
  %336 = vmatprep.subr.bf16.mxu0 0
  %337 = vmatpush1.bf16.msra.mxu0 0
  %338 = vmatprep.subr.bf16.mxu0 0
  %339 = vmatpush1.bf16.msra.mxu0 0
  %340 = vmatprep.subr.bf16.mxu0 0
  %341 = vmatpush1.bf16.msra.mxu0 0
  %342 = vmatprep.subr.bf16.mxu0 0
  %343 = vmatpush1.bf16.msra.mxu0 0
  %344 = vmatprep.mubr.bf16.mxu0 0
  %345 = vmatmul.mubr.bf16.gmra.mrb[0].mxu0 %v232
  %v346 = vpop.f32.mrb[0].mxu0
  %v347 = vadd.f32 0.0, %v346
  %v348 = vpop.f32.mrb[0].mxu0
  %v349 = vpop.f32.mrb[0].mxu0
  %v350 = vadd.f32 0.0, %v349
  %v351 = vpop.f32.mrb[0].mxu0
  %352 = vmatprep.mubr.bf16.mxu0 0
  %353 = vmatmul.mubr.bf16.gmra.mrb[0].mxu0 %v233
  %v354 = vpop.f32.mrb[0].mxu0
  %v355 = vadd.f32 0.0, %v354
  %v356 = vpop.f32.mrb[0].mxu0
  %v357 = vpop.f32.mrb[0].mxu0
  %v358 = vadd.f32 0.0, %v357
  %v359 = vpop.f32.mrb[0].mxu0
  %360 = vmatprep.mubr.bf16.mxu0 0
  %361 = vmatmul.mubr.bf16.gmra.mrb[0].mxu0 %v234
  %v362 = vpop.f32.mrb[0].mxu0
  %v363 = vadd.f32 0.0, %v362
  %v364 = vpop.f32.mrb[0].mxu0
  %v365 = vpop.f32.mrb[0].mxu0
  %v366 = vadd.f32 0.0, %v365
  %v367 = vpop.f32.mrb[0].mxu0
  %368 = vmatprep.mubr.bf16.mxu0 0
  %369 = vmatmul.mubr.bf16.gmra.mrb[0].mxu0 %v235
  %v370 = vpop.f32.mrb[0].mxu0
  %v371 = vadd.f32 0.0, %v370
  %v372 = vpop.f32.mrb[0].mxu0
  %v373 = vpop.f32.mrb[0].mxu0
  %v374 = vadd.f32 0.0, %v373
  %v375 = vpop.f32.mrb[0].mxu0
  %376 = vmatprep.mubr.bf16.mxu0 0
  %377 = vmatmul.mubr.bf16.gmra.mrb[0].mxu0 %v236
  %v378 = vpop.f32.mrb[0].mxu0
  %v379 = vadd.f32 0.0, %v378
  %v380 = vpop.f32.mrb[0].mxu0
  %v381 = vpop.f32.mrb[0].mxu0
  %v382 = vadd.f32 0.0, %v381
  %v383 = vpop.f32.mrb[0].mxu0
  %384 = vmatprep.mubr.bf16.mxu0 0
  %385 = vmatmul.mubr.bf16.gmra.mrb[0].mxu0 %v237
  %v386 = vpop.f32.mrb[0].mxu0
  %v387 = vadd.f32 0.0, %v386
  %v388 = vpop.f32.mrb[0].mxu0
  %v389 = vpop.f32.mrb[0].mxu0
  %v390 = vadd.f32 0.0, %v389
  %v391 = vpop.f32.mrb[0].mxu0
  %392 = vmatprep.mubr.bf16.mxu0 0
  %393 = vmatmul.mubr.bf16.gmra.mrb[0].mxu0 %v238
  %v394 = vpop.f32.mrb[0].mxu0
  %v395 = vadd.f32 0.0, %v394
  %v396 = vpop.f32.mrb[0].mxu0
  %v397 = vpop.f32.mrb[0].mxu0
  %v398 = vadd.f32 0.0, %v397
  %v399 = vpop.f32.mrb[0].mxu0
  %400 = vmatprep.mubr.bf16.mxu0 0
  %401 = vmatmul.mubr.bf16.gmra.mrb[0].mxu0 %v239
  %v402 = vpop.f32.mrb[0].mxu0
  %v403 = vadd.f32 0.0, %v402
  %v404 = vpop.f32.mrb[0].mxu0
  %v405 = vpop.f32.mrb[0].mxu0
  %v406 = vadd.f32 0.0, %v405
  %v407 = vpop.f32.mrb[0].mxu0
  %408 = vmatprep.mubr.bf16.mxu0 0
  %409 = vmatmul.mubr.bf16.gmra.mrb[0].mxu0 %v240
  %v410 = vpop.f32.mrb[0].mxu0
  %v411 = vadd.f32 0.0, %v410
  %v412 = vpop.f32.mrb[0].mxu0
  %v413 = vpop.f32.mrb[0].mxu0
  %v414 = vadd.f32 0.0, %v413
  %v415 = vpop.f32.mrb[0].mxu0
  %416 = vmatprep.mubr.bf16.mxu0 0
  %417 = vmatmul.mubr.bf16.gmra.mrb[0].mxu0 %v241
  %v418 = vpop.f32.mrb[0].mxu0
  %v419 = vadd.f32 0.0, %v418
  %v420 = vpop.f32.mrb[0].mxu0
  %v421 = vpop.f32.mrb[0].mxu0
  %v422 = vadd.f32 0.0, %v421
  %v423 = vpop.f32.mrb[0].mxu0
  %424 = vmatprep.mubr.bf16.mxu0 0
  %425 = vmatmul.mubr.bf16.gmra.mrb[0].mxu0 %v242
  %v426 = vpop.f32.mrb[0].mxu0
  %v427 = vadd.f32 0.0, %v426
  %v428 = vpop.f32.mrb[0].mxu0
  %v429 = vpop.f32.mrb[0].mxu0
  %v430 = vadd.f32 0.0, %v429
  %v431 = vpop.f32.mrb[0].mxu0
  %432 = vmatprep.mubr.bf16.mxu0 0
  %433 = vmatmul.mubr.bf16.gmra.mrb[0].mxu0 %v243
  %v434 = vpop.f32.mrb[0].mxu0
  %v435 = vadd.f32 0.0, %v434
  %v436 = vpop.f32.mrb[0].mxu0
  %v437 = vpop.f32.mrb[0].mxu0
  %v438 = vadd.f32 0.0, %v437
  %v439 = vpop.f32.mrb[0].mxu0
  %440 = vmatprep.mubr.bf16.mxu0 0
  %441 = vmatmul.mubr.bf16.gmra.mrb[0].mxu0 %v244
  %v442 = vpop.f32.mrb[0].mxu0
  %v443 = vadd.f32 0.0, %v442
  %v444 = vpop.f32.mrb[0].mxu0
  %v445 = vpop.f32.mrb[0].mxu0
  %v446 = vadd.f32 0.0, %v445
  %v447 = vpop.f32.mrb[0].mxu0
  %448 = vmatprep.mubr.bf16.mxu0 0
  %449 = vmatmul.mubr.bf16.gmra.mrb[0].mxu0 %v245
  %v450 = vpop.f32.mrb[0].mxu0
  %v451 = vadd.f32 0.0, %v450
  %v452 = vpop.f32.mrb[0].mxu0
  %v453 = vpop.f32.mrb[0].mxu0
  %v454 = vadd.f32 0.0, %v453
  %v455 = vpop.f32.mrb[0].mxu0
  %456 = vmatprep.mubr.bf16.mxu0 0
  %457 = vmatmul.mubr.bf16.gmra.mrb[0].mxu0 %v246
  %v458 = vpop.f32.mrb[0].mxu0
  %v459 = vadd.f32 0.0, %v458
  %v460 = vpop.f32.mrb[0].mxu0
  %v461 = vpop.f32.mrb[0].mxu0
  %v462 = vadd.f32 0.0, %v461
  %v463 = vpop.f32.mrb[0].mxu0
  %464 = vmatprep.mubr.bf16.mxu0 0
  %465 = vmatmul.mubr.bf16.gmra.mrb[0].mxu0 %v247
  %v466 = vpop.f32.mrb[0].mxu0
  %v467 = vadd.f32 0.0, %v466
  %v468 = vpop.f32.mrb[0].mxu0
  %v469 = vpop.f32.mrb[0].mxu0
  %v470 = vadd.f32 0.0, %v469
  %v471 = vpop.f32.mrb[0].mxu0
  %472 = vdwg.mxu0
  %v473 = vlaneseq
  %v474 = vshrl.u32 %v473, 7
  %v475 = vsub.s32 0, %v474
  %v476 = vrot.slane %v133, %v475
  %477 = vmatprep.subr.mxu0 0.0
  %478 = vmatpush1.msra.mxu0 %v347
  %479 = vmatprep.subr.mxu0 0.0
  %480 = vmatpush1.msra.mxu0 %v350
  %481 = vmatprep.subr.mxu0 0.0
  %482 = vmatpush1.msra.mxu0 %v355
  %483 = vmatprep.subr.mxu0 0.0
  %484 = vmatpush1.msra.mxu0 %v358
  %485 = vmatprep.subr.mxu0 0.0
  %486 = vmatpush1.msra.mxu0 %v363
  %487 = vmatprep.subr.mxu0 0.0
  %488 = vmatpush1.msra.mxu0 %v366
  %489 = vmatprep.subr.mxu0 0.0
  %490 = vmatpush1.msra.mxu0 %v371
  %491 = vmatprep.subr.mxu0 0.0
  %492 = vmatpush1.msra.mxu0 %v374
  %493 = vmatprep.subr.mxu0 0.0
  %494 = vmatpush1.msra.mxu0 %v379
  %495 = vmatprep.subr.mxu0 0.0
  %496 = vmatpush1.msra.mxu0 %v382
  %497 = vmatprep.subr.mxu0 0.0
  %498 = vmatpush1.msra.mxu0 %v387
  %499 = vmatprep.subr.mxu0 0.0
  %500 = vmatpush1.msra.mxu0 %v390
  %501 = vmatprep.subr.mxu0 0.0
  %502 = vmatpush1.msra.mxu0 %v395
  %503 = vmatprep.subr.mxu0 0.0
  %504 = vmatpush1.msra.mxu0 %v398
  %505 = vmatprep.subr.mxu0 0.0
  %506 = vmatpush1.msra.mxu0 %v403
  %507 = vmatprep.subr.mxu0 0.0
  %508 = vmatpush1.msra.mxu0 %v406
  %509 = vmatprep.subr.mxu0 0.0
  %510 = vmatpush1.msra.mxu0 %v411
  %511 = vmatprep.subr.mxu0 0.0
  %512 = vmatpush1.msra.mxu0 %v414
  %513 = vmatprep.subr.mxu0 0.0
  %514 = vmatpush1.msra.mxu0 %v419
  %515 = vmatprep.subr.mxu0 0.0
  %516 = vmatpush1.msra.mxu0 %v422
  %517 = vmatprep.subr.mxu0 0.0
  %518 = vmatpush1.msra.mxu0 %v427
  %519 = vmatprep.subr.mxu0 0.0
  %520 = vmatpush1.msra.mxu0 %v430
  %521 = vmatprep.subr.mxu0 0.0
  %522 = vmatpush1.msra.mxu0 %v435
  %523 = vmatprep.subr.mxu0 0.0
  %524 = vmatpush1.msra.mxu0 %v438
  %525 = vmatprep.subr.mxu0 0.0
  %526 = vmatpush1.msra.mxu0 %v443
  %527 = vmatprep.subr.mxu0 0.0
  %528 = vmatpush1.msra.mxu0 %v446
  %529 = vmatprep.subr.mxu0 0.0
  %530 = vmatpush1.msra.mxu0 %v451
  %531 = vmatprep.subr.mxu0 0.0
  %532 = vmatpush1.msra.mxu0 %v454
  %533 = vmatprep.subr.mxu0 0.0
  %534 = vmatpush1.msra.mxu0 %v459
  %535 = vmatprep.subr.mxu0 0.0
  %536 = vmatpush1.msra.mxu0 %v462
  %537 = vmatprep.subr.mxu0 0.0
  %538 = vmatpush1.msra.mxu0 %v467
  %539 = vmatprep.subr.mxu0 0.0
  %540 = vmatpush1.msra.mxu0 %v470
  %541 = vmatprep.mubr.f32.mxu0 %v22
  %542 = vmatmul.mubr.f32.gmra.mrb[0].mxu0 %v21
  %v543 = vpop.f32.mrb[0].mxu0
  %v544 = vadd.f32 %v476, %v543
  %v545 = vpop.f32.mrb[0].mxu0
  %546 = vmatprep.mubr.f32.mxu0 %v24
  %547 = vmatmul.mubr.f32.gmra.mrb[0].mxu0 %v23
  %v548 = vpop.f32.mrb[0].mxu0
  %v549 = vadd.f32 %v476, %v548
  %v550 = vpop.f32.mrb[0].mxu0
  %551 = vmatprep.mubr.f32.mxu0 %v26
  %552 = vmatmul.mubr.f32.gmra.mrb[0].mxu0 %v25
  %v553 = vpop.f32.mrb[0].mxu0
  %v554 = vadd.f32 %v476, %v553
  %v555 = vpop.f32.mrb[0].mxu0
  %556 = vmatprep.mubr.f32.mxu0 %v28
  %557 = vmatmul.mubr.f32.gmra.mrb[0].mxu0 %v27
  %v558 = vpop.f32.mrb[0].mxu0
  %v559 = vadd.f32 %v476, %v558
  %v560 = vpop.f32.mrb[0].mxu0
  %561 = vmatprep.mubr.f32.mxu0 %v30
  %562 = vmatmul.mubr.f32.gmra.mrb[0].mxu0 %v29
  %v563 = vpop.f32.mrb[0].mxu0
  %v564 = vadd.f32 %v476, %v563
  %v565 = vpop.f32.mrb[0].mxu0
  %566 = vmatprep.mubr.f32.mxu0 %v32
  %567 = vmatmul.mubr.f32.gmra.mrb[0].mxu0 %v31
  %v568 = vpop.f32.mrb[0].mxu0
  %v569 = vadd.f32 %v476, %v568
  %v570 = vpop.f32.mrb[0].mxu0
  %571 = vmatprep.mubr.f32.mxu0 %v34
  %572 = vmatmul.mubr.f32.gmra.mrb[0].mxu0 %v33
  %v573 = vpop.f32.mrb[0].mxu0
  %v574 = vadd.f32 %v476, %v573
  %v575 = vpop.f32.mrb[0].mxu0
  %576 = vmatprep.mubr.f32.mxu0 %v36
  %577 = vmatmul.mubr.f32.gmra.mrb[0].mxu0 %v35
  %v578 = vpop.f32.mrb[0].mxu0
  %v579 = vadd.f32 %v476, %v578
  %v580 = vpop.f32.mrb[0].mxu0
  %581 = vmatprep.mubr.f32.mxu0 %v38
  %582 = vmatmul.mubr.f32.gmra.mrb[0].mxu0 %v37
  %v583 = vpop.f32.mrb[0].mxu0
  %v584 = vadd.f32 %v476, %v583
  %v585 = vpop.f32.mrb[0].mxu0
  %586 = vmatprep.mubr.f32.mxu0 %v40
  %587 = vmatmul.mubr.f32.gmra.mrb[0].mxu0 %v39
  %v588 = vpop.f32.mrb[0].mxu0
  %v589 = vadd.f32 %v476, %v588
  %v590 = vpop.f32.mrb[0].mxu0
  %591 = vmatprep.mubr.f32.mxu0 %v42
  %592 = vmatmul.mubr.f32.gmra.mrb[0].mxu0 %v41
  %v593 = vpop.f32.mrb[0].mxu0
  %v594 = vadd.f32 %v476, %v593
  %v595 = vpop.f32.mrb[0].mxu0
  %596 = vmatprep.mubr.f32.mxu0 %v44
  %597 = vmatmul.mubr.f32.gmra.mrb[0].mxu0 %v43
  %v598 = vpop.f32.mrb[0].mxu0
  %v599 = vadd.f32 %v476, %v598
  %v600 = vpop.f32.mrb[0].mxu0
  %601 = vmatprep.mubr.f32.mxu0 %v46
  %602 = vmatmul.mubr.f32.gmra.mrb[0].mxu0 %v45
  %v603 = vpop.f32.mrb[0].mxu0
  %v604 = vadd.f32 %v476, %v603
  %v605 = vpop.f32.mrb[0].mxu0
  %606 = vmatprep.mubr.f32.mxu0 %v48
  %607 = vmatmul.mubr.f32.gmra.mrb[0].mxu0 %v47
  %v608 = vpop.f32.mrb[0].mxu0
  %v609 = vadd.f32 %v476, %v608
  %v610 = vpop.f32.mrb[0].mxu0
  %611 = vmatprep.mubr.f32.mxu0 %v50
  %612 = vmatmul.mubr.f32.gmra.mrb[0].mxu0 %v49
  %v613 = vpop.f32.mrb[0].mxu0
  %v614 = vadd.f32 %v476, %v613
  %v615 = vpop.f32.mrb[0].mxu0
  %616 = vmatprep.mubr.f32.mxu0 %v52
  %617 = vmatmul.mubr.f32.gmra.mrb[0].mxu0 %v51
  %v618 = vpop.f32.mrb[0].mxu0
  %v619 = vadd.f32 %v476, %v618
  %v620 = vpop.f32.mrb[0].mxu0
  %621 = vmatprep.mubr.f32.mxu0 %v54
  %622 = vmatmul.mubr.f32.gmra.mrb[0].mxu0 %v53
  %v623 = vpop.f32.mrb[0].mxu0
  %v624 = vadd.f32 %v476, %v623
  %v625 = vpop.f32.mrb[0].mxu0
  %626 = vmatprep.mubr.f32.mxu0 %v56
  %627 = vmatmul.mubr.f32.gmra.mrb[0].mxu0 %v55
  %v628 = vpop.f32.mrb[0].mxu0
  %v629 = vadd.f32 %v476, %v628
  %v630 = vpop.f32.mrb[0].mxu0
  %631 = vmatprep.mubr.f32.mxu0 %v58
  %632 = vmatmul.mubr.f32.gmra.mrb[0].mxu0 %v57
  %v633 = vpop.f32.mrb[0].mxu0
  %v634 = vadd.f32 %v476, %v633
  %v635 = vpop.f32.mrb[0].mxu0
  %636 = vmatprep.mubr.f32.mxu0 %v60
  %637 = vmatmul.mubr.f32.gmra.mrb[0].mxu0 %v59
  %v638 = vpop.f32.mrb[0].mxu0
  %v639 = vadd.f32 %v476, %v638
  %v640 = vpop.f32.mrb[0].mxu0
  %641 = vmatprep.mubr.f32.mxu0 %v62
  %642 = vmatmul.mubr.f32.gmra.mrb[0].mxu0 %v61
  %v643 = vpop.f32.mrb[0].mxu0
  %v644 = vadd.f32 %v476, %v643
  %v645 = vpop.f32.mrb[0].mxu0
  %646 = vmatprep.mubr.f32.mxu0 %v64
  %647 = vmatmul.mubr.f32.gmra.mrb[0].mxu0 %v63
  %v648 = vpop.f32.mrb[0].mxu0
  %v649 = vadd.f32 %v476, %v648
  %v650 = vpop.f32.mrb[0].mxu0
  %651 = vmatprep.mubr.f32.mxu0 %v66
  %652 = vmatmul.mubr.f32.gmra.mrb[0].mxu0 %v65
  %v653 = vpop.f32.mrb[0].mxu0
  %v654 = vadd.f32 %v476, %v653
  %v655 = vpop.f32.mrb[0].mxu0
  %656 = vmatprep.mubr.f32.mxu0 %v68
  %657 = vmatmul.mubr.f32.gmra.mrb[0].mxu0 %v67
  %v658 = vpop.f32.mrb[0].mxu0
  %v659 = vadd.f32 %v476, %v658
  %v660 = vpop.f32.mrb[0].mxu0
  %661 = vmatprep.mubr.f32.mxu0 %v70
  %662 = vmatmul.mubr.f32.gmra.mrb[0].mxu0 %v69
  %v663 = vpop.f32.mrb[0].mxu0
  %v664 = vadd.f32 %v476, %v663
  %v665 = vpop.f32.mrb[0].mxu0
  %666 = vmatprep.mubr.f32.mxu0 %v72
  %667 = vmatmul.mubr.f32.gmra.mrb[0].mxu0 %v71
  %v668 = vpop.f32.mrb[0].mxu0
  %v669 = vadd.f32 %v476, %v668
  %v670 = vpop.f32.mrb[0].mxu0
  %671 = vmatprep.mubr.f32.mxu0 %v74
  %672 = vmatmul.mubr.f32.gmra.mrb[0].mxu0 %v73
  %v673 = vpop.f32.mrb[0].mxu0
  %v674 = vadd.f32 %v476, %v673
  %v675 = vpop.f32.mrb[0].mxu0
  %676 = vmatprep.mubr.f32.mxu0 %v76
  %677 = vmatmul.mubr.f32.gmra.mrb[0].mxu0 %v75
  %v678 = vpop.f32.mrb[0].mxu0
  %v679 = vadd.f32 %v476, %v678
  %v680 = vpop.f32.mrb[0].mxu0
  %681 = vmatprep.mubr.f32.mxu0 %v78
  %682 = vmatmul.mubr.f32.gmra.mrb[0].mxu0 %v77
  %v683 = vpop.f32.mrb[0].mxu0
  %v684 = vadd.f32 %v476, %v683
  %v685 = vpop.f32.mrb[0].mxu0
  %686 = vmatprep.mubr.f32.mxu0 %v80
  %687 = vmatmul.mubr.f32.gmra.mrb[0].mxu0 %v79
  %v688 = vpop.f32.mrb[0].mxu0
  %v689 = vadd.f32 %v476, %v688
  %v690 = vpop.f32.mrb[0].mxu0
  %691 = vmatprep.mubr.f32.mxu0 %v82
  %692 = vmatmul.mubr.f32.gmra.mrb[0].mxu0 %v81
  %v693 = vpop.f32.mrb[0].mxu0
  %v694 = vadd.f32 %v476, %v693
  %v695 = vpop.f32.mrb[0].mxu0
  %696 = vmatprep.mubr.f32.mxu0 %v84
  %697 = vmatmul.mubr.f32.gmra.mrb[0].mxu0 %v83
  %v698 = vpop.f32.mrb[0].mxu0
  %v699 = vadd.f32 %v476, %v698
  %v700 = vpop.f32.mrb[0].mxu0
  %701 = vdwg.mxu0
  %v702 = vmax.f32 %v544, 0.0
  %v703 = vmax.f32 %v549, 0.0
  %v704 = vmax.f32 %v554, 0.0
  %v705 = vmax.f32 %v559, 0.0
  %v706 = vmax.f32 %v564, 0.0
  %v707 = vmax.f32 %v569, 0.0
  %v708 = vmax.f32 %v574, 0.0
  %v709 = vmax.f32 %v579, 0.0
  %v710 = vmax.f32 %v584, 0.0
  %v711 = vmax.f32 %v589, 0.0
  %v712 = vmax.f32 %v594, 0.0
  %v713 = vmax.f32 %v599, 0.0
  %v714 = vmax.f32 %v604, 0.0
  %v715 = vmax.f32 %v609, 0.0
  %v716 = vmax.f32 %v614, 0.0
  %v717 = vmax.f32 %v619, 0.0
  %v718 = vmax.f32 %v624, 0.0
  %v719 = vmax.f32 %v629, 0.0
  %v720 = vmax.f32 %v634, 0.0
  %v721 = vmax.f32 %v639, 0.0
  %v722 = vmax.f32 %v644, 0.0
  %v723 = vmax.f32 %v649, 0.0
  %v724 = vmax.f32 %v654, 0.0
  %v725 = vmax.f32 %v659, 0.0
  %v726 = vmax.f32 %v664, 0.0
  %v727 = vmax.f32 %v669, 0.0
  %v728 = vmax.f32 %v674, 0.0
  %v729 = vmax.f32 %v679, 0.0
  %v730 = vmax.f32 %v684, 0.0
  %v731 = vmax.f32 %v689, 0.0
  %v732 = vmax.f32 %v694, 0.0
  %v733 = vmax.f32 %v699, 0.0
  %v734 = vpack.c.bf16 %v703, %v702
  %v735 = vpack.c.bf16 %v705, %v704
  %v736 = vpack.c.bf16 %v707, %v706
  %v737 = vpack.c.bf16 %v709, %v708
  %v738 = vpack.c.bf16 %v711, %v710
  %v739 = vpack.c.bf16 %v713, %v712
  %v740 = vpack.c.bf16 %v715, %v714
  %v741 = vpack.c.bf16 %v717, %v716
  %v742 = vpack.c.bf16 %v719, %v718
  %v743 = vpack.c.bf16 %v721, %v720
  %v744 = vpack.c.bf16 %v723, %v722
  %v745 = vpack.c.bf16 %v725, %v724
  %v746 = vpack.c.bf16 %v727, %v726
  %v747 = vpack.c.bf16 %v729, %v728
  %v748 = vpack.c.bf16 %v731, %v730
  %v749 = vpack.c.bf16 %v733, %v732
  %v766 = vunpack.c.l.b16 %v101
  %v767 = vunpack.c.l.b16 %v102
  %v768 = vunpack.c.l.b16 %v103
  %v769 = vunpack.c.l.b16 %v104
  %v770 = vunpack.c.l.b16 %v105
  %v771 = vunpack.c.l.b16 %v106
  %v772 = vunpack.c.l.b16 %v107
  %v773 = vunpack.c.l.b16 %v108
  %v774 = vunpack.c.l.b16 %v109
  %v775 = vunpack.c.l.b16 %v110
  %v776 = vunpack.c.l.b16 %v111
  %v777 = vunpack.c.l.b16 %v112
  %v778 = vunpack.c.l.b16 %v113
  %v779 = vunpack.c.l.b16 %v114
  %v780 = vunpack.c.l.b16 %v115
  %v781 = vunpack.c.l.b16 %v116
  %v782 = vpack.c.b16 %v767, %v766
  %v783 = vpack.c.b16 %v769, %v768
  %v784 = vpack.c.b16 %v771, %v770
  %v785 = vpack.c.b16 %v773, %v772
  %v786 = vpack.c.b16 %v775, %v774
  %v787 = vpack.c.b16 %v777, %v776
  %v788 = vpack.c.b16 %v779, %v778
  %v789 = vpack.c.b16 %v781, %v780
  %798 = vmatprep.subr.bf16.mxu0 0
  %799 = vmatpush1.bf16.msra.mxu0 %v782
  %800 = vmatprep.subr.bf16.mxu0 0
  %801 = vmatpush1.bf16.msra.mxu0 %v783
  %802 = vmatprep.subr.bf16.mxu0 0
  %803 = vmatpush1.bf16.msra.mxu0 %v784
  %804 = vmatprep.subr.bf16.mxu0 0
  %805 = vmatpush1.bf16.msra.mxu0 %v785
  %806 = vmatprep.subr.bf16.mxu0 0
  %807 = vmatpush1.bf16.msra.mxu0 %v786
  %808 = vmatprep.subr.bf16.mxu0 0
  %809 = vmatpush1.bf16.msra.mxu0 %v787
  %810 = vmatprep.subr.bf16.mxu0 0
  %811 = vmatpush1.bf16.msra.mxu0 %v788
  %812 = vmatprep.subr.bf16.mxu0 0
  %813 = vmatpush1.bf16.msra.mxu0 %v789
  %814 = vmatprep.subr.bf16.mxu0 0
  %815 = vmatpush1.bf16.msra.mxu0 0
  %816 = vmatprep.subr.bf16.mxu0 0
  %817 = vmatpush1.bf16.msra.mxu0 0
  %818 = vmatprep.subr.bf16.mxu0 0
  %819 = vmatpush1.bf16.msra.mxu0 0
  %820 = vmatprep.subr.bf16.mxu0 0
  %821 = vmatpush1.bf16.msra.mxu0 0
  %822 = vmatprep.subr.bf16.mxu0 0
  %823 = vmatpush1.bf16.msra.mxu0 0
  %824 = vmatprep.subr.bf16.mxu0 0
  %825 = vmatpush1.bf16.msra.mxu0 0
  %826 = vmatprep.subr.bf16.mxu0 0
  %827 = vmatpush1.bf16.msra.mxu0 0
  %828 = vmatprep.subr.bf16.mxu0 0
  %829 = vmatpush1.bf16.msra.mxu0 0
  %830 = vmatprep.mubr.bf16.mxu0 0
  %831 = vmatmul.mubr.bf16.gmra.mrb[0].mxu0 %v734
  %v832 = vpop.f32.mrb[0].mxu0
  %v833 = vadd.f32 0.0, %v832
  %v834 = vpop.f32.mrb[0].mxu0
  %v835 = vpop.f32.mrb[0].mxu0
  %v836 = vadd.f32 0.0, %v835
  %v837 = vpop.f32.mrb[0].mxu0
  %838 = vmatprep.mubr.bf16.mxu0 0
  %839 = vmatmul.mubr.bf16.gmra.mrb[0].mxu0 %v735
  %v840 = vpop.f32.mrb[0].mxu0
  %v841 = vadd.f32 0.0, %v840
  %v842 = vpop.f32.mrb[0].mxu0
  %v843 = vpop.f32.mrb[0].mxu0
  %v844 = vadd.f32 0.0, %v843
  %v845 = vpop.f32.mrb[0].mxu0
  %846 = vmatprep.mubr.bf16.mxu0 0
  %847 = vmatmul.mubr.bf16.gmra.mrb[0].mxu0 %v736
  %v848 = vpop.f32.mrb[0].mxu0
  %v849 = vadd.f32 0.0, %v848
  %v850 = vpop.f32.mrb[0].mxu0
  %v851 = vpop.f32.mrb[0].mxu0
  %v852 = vadd.f32 0.0, %v851
  %v853 = vpop.f32.mrb[0].mxu0
  %854 = vmatprep.mubr.bf16.mxu0 0
  %855 = vmatmul.mubr.bf16.gmra.mrb[0].mxu0 %v737
  %v856 = vpop.f32.mrb[0].mxu0
  %v857 = vadd.f32 0.0, %v856
  %v858 = vpop.f32.mrb[0].mxu0
  %v859 = vpop.f32.mrb[0].mxu0
  %v860 = vadd.f32 0.0, %v859
  %v861 = vpop.f32.mrb[0].mxu0
  %862 = vmatprep.mubr.bf16.mxu0 0
  %863 = vmatmul.mubr.bf16.gmra.mrb[0].mxu0 %v738
  %v864 = vpop.f32.mrb[0].mxu0
  %v865 = vadd.f32 0.0, %v864
  %v866 = vpop.f32.mrb[0].mxu0
  %v867 = vpop.f32.mrb[0].mxu0
  %v868 = vadd.f32 0.0, %v867
  %v869 = vpop.f32.mrb[0].mxu0
  %870 = vmatprep.mubr.bf16.mxu0 0
  %871 = vmatmul.mubr.bf16.gmra.mrb[0].mxu0 %v739
  %v872 = vpop.f32.mrb[0].mxu0
  %v873 = vadd.f32 0.0, %v872
  %v874 = vpop.f32.mrb[0].mxu0
  %v875 = vpop.f32.mrb[0].mxu0
  %v876 = vadd.f32 0.0, %v875
  %v877 = vpop.f32.mrb[0].mxu0
  %878 = vmatprep.mubr.bf16.mxu0 0
  %879 = vmatmul.mubr.bf16.gmra.mrb[0].mxu0 %v740
  %v880 = vpop.f32.mrb[0].mxu0
  %v881 = vadd.f32 0.0, %v880
  %v882 = vpop.f32.mrb[0].mxu0
  %v883 = vpop.f32.mrb[0].mxu0
  %v884 = vadd.f32 0.0, %v883
  %v885 = vpop.f32.mrb[0].mxu0
  %886 = vmatprep.mubr.bf16.mxu0 0
  %887 = vmatmul.mubr.bf16.gmra.mrb[0].mxu0 %v741
  %v888 = vpop.f32.mrb[0].mxu0
  %v889 = vadd.f32 0.0, %v888
  %v890 = vpop.f32.mrb[0].mxu0
  %v891 = vpop.f32.mrb[0].mxu0
  %v892 = vadd.f32 0.0, %v891
  %v893 = vpop.f32.mrb[0].mxu0
  %894 = vmatprep.mubr.bf16.mxu0 0
  %895 = vmatmul.mubr.bf16.gmra.mrb[0].mxu0 %v742
  %v896 = vpop.f32.mrb[0].mxu0
  %v897 = vadd.f32 0.0, %v896
  %v898 = vpop.f32.mrb[0].mxu0
  %v899 = vpop.f32.mrb[0].mxu0
  %v900 = vadd.f32 0.0, %v899
  %v901 = vpop.f32.mrb[0].mxu0
  %902 = vmatprep.mubr.bf16.mxu0 0
  %903 = vmatmul.mubr.bf16.gmra.mrb[0].mxu0 %v743
  %v904 = vpop.f32.mrb[0].mxu0
  %v905 = vadd.f32 0.0, %v904
  %v906 = vpop.f32.mrb[0].mxu0
  %v907 = vpop.f32.mrb[0].mxu0
  %v908 = vadd.f32 0.0, %v907
  %v909 = vpop.f32.mrb[0].mxu0
  %910 = vmatprep.mubr.bf16.mxu0 0
  %911 = vmatmul.mubr.bf16.gmra.mrb[0].mxu0 %v744
  %v912 = vpop.f32.mrb[0].mxu0
  %v913 = vadd.f32 0.0, %v912
  %v914 = vpop.f32.mrb[0].mxu0
  %v915 = vpop.f32.mrb[0].mxu0
  %v916 = vadd.f32 0.0, %v915
  %v917 = vpop.f32.mrb[0].mxu0
  %918 = vmatprep.mubr.bf16.mxu0 0
  %919 = vmatmul.mubr.bf16.gmra.mrb[0].mxu0 %v745
  %v920 = vpop.f32.mrb[0].mxu0
  %v921 = vadd.f32 0.0, %v920
  %v922 = vpop.f32.mrb[0].mxu0
  %v923 = vpop.f32.mrb[0].mxu0
  %v924 = vadd.f32 0.0, %v923
  %v925 = vpop.f32.mrb[0].mxu0
  %926 = vmatprep.mubr.bf16.mxu0 0
  %927 = vmatmul.mubr.bf16.gmra.mrb[0].mxu0 %v746
  %v928 = vpop.f32.mrb[0].mxu0
  %v929 = vadd.f32 0.0, %v928
  %v930 = vpop.f32.mrb[0].mxu0
  %v931 = vpop.f32.mrb[0].mxu0
  %v932 = vadd.f32 0.0, %v931
  %v933 = vpop.f32.mrb[0].mxu0
  %934 = vmatprep.mubr.bf16.mxu0 0
  %935 = vmatmul.mubr.bf16.gmra.mrb[0].mxu0 %v747
  %v936 = vpop.f32.mrb[0].mxu0
  %v937 = vadd.f32 0.0, %v936
  %v938 = vpop.f32.mrb[0].mxu0
  %v939 = vpop.f32.mrb[0].mxu0
  %v940 = vadd.f32 0.0, %v939
  %v941 = vpop.f32.mrb[0].mxu0
  %942 = vmatprep.mubr.bf16.mxu0 0
  %943 = vmatmul.mubr.bf16.gmra.mrb[0].mxu0 %v748
  %v944 = vpop.f32.mrb[0].mxu0
  %v945 = vadd.f32 0.0, %v944
  %v946 = vpop.f32.mrb[0].mxu0
  %v947 = vpop.f32.mrb[0].mxu0
  %v948 = vadd.f32 0.0, %v947
  %v949 = vpop.f32.mrb[0].mxu0
  %950 = vmatprep.mubr.bf16.mxu0 0
  %951 = vmatmul.mubr.bf16.gmra.mrb[0].mxu0 %v749
  %v952 = vpop.f32.mrb[0].mxu0
  %v953 = vadd.f32 0.0, %v952
  %v954 = vpop.f32.mrb[0].mxu0
  %v955 = vpop.f32.mrb[0].mxu0
  %v956 = vadd.f32 0.0, %v955
  %v957 = vpop.f32.mrb[0].mxu0
  %958 = vdwg.mxu0
  %v959 = vlaneseq
  %v960 = vshrl.u32 %v959, 7
  %v961 = vsub.s32 0, %v960
  %v962 = vrot.slane %v134, %v961
  %963 = vmatprep.subr.mxu0 0.0
  %964 = vmatpush1.msra.mxu0 %v833
  %965 = vmatprep.subr.mxu0 0.0
  %966 = vmatpush1.msra.mxu0 %v836
  %967 = vmatprep.subr.mxu0 0.0
  %968 = vmatpush1.msra.mxu0 %v841
  %969 = vmatprep.subr.mxu0 0.0
  %970 = vmatpush1.msra.mxu0 %v844
  %971 = vmatprep.subr.mxu0 0.0
  %972 = vmatpush1.msra.mxu0 %v849
  %973 = vmatprep.subr.mxu0 0.0
  %974 = vmatpush1.msra.mxu0 %v852
  %975 = vmatprep.subr.mxu0 0.0
  %976 = vmatpush1.msra.mxu0 %v857
  %977 = vmatprep.subr.mxu0 0.0
  %978 = vmatpush1.msra.mxu0 %v860
  %979 = vmatprep.subr.mxu0 0.0
  %980 = vmatpush1.msra.mxu0 %v865
  %981 = vmatprep.subr.mxu0 0.0
  %982 = vmatpush1.msra.mxu0 %v868
  %983 = vmatprep.subr.mxu0 0.0
  %984 = vmatpush1.msra.mxu0 %v873
  %985 = vmatprep.subr.mxu0 0.0
  %986 = vmatpush1.msra.mxu0 %v876
  %987 = vmatprep.subr.mxu0 0.0
  %988 = vmatpush1.msra.mxu0 %v881
  %989 = vmatprep.subr.mxu0 0.0
  %990 = vmatpush1.msra.mxu0 %v884
  %991 = vmatprep.subr.mxu0 0.0
  %992 = vmatpush1.msra.mxu0 %v889
  %993 = vmatprep.subr.mxu0 0.0
  %994 = vmatpush1.msra.mxu0 %v892
  %995 = vmatprep.subr.mxu0 0.0
  %996 = vmatpush1.msra.mxu0 %v897
  %997 = vmatprep.subr.mxu0 0.0
  %998 = vmatpush1.msra.mxu0 %v900
  %999 = vmatprep.subr.mxu0 0.0
  %1000 = vmatpush1.msra.mxu0 %v905
  %1001 = vmatprep.subr.mxu0 0.0
  %1002 = vmatpush1.msra.mxu0 %v908
  %1003 = vmatprep.subr.mxu0 0.0
  %1004 = vmatpush1.msra.mxu0 %v913
  %1005 = vmatprep.subr.mxu0 0.0
  %1006 = vmatpush1.msra.mxu0 %v916
  %1007 = vmatprep.subr.mxu0 0.0
  %1008 = vmatpush1.msra.mxu0 %v921
  %1009 = vmatprep.subr.mxu0 0.0
  %1010 = vmatpush1.msra.mxu0 %v924
  %1011 = vmatprep.subr.mxu0 0.0
  %1012 = vmatpush1.msra.mxu0 %v929
  %1013 = vmatprep.subr.mxu0 0.0
  %1014 = vmatpush1.msra.mxu0 %v932
  %1015 = vmatprep.subr.mxu0 0.0
  %1016 = vmatpush1.msra.mxu0 %v937
  %1017 = vmatprep.subr.mxu0 0.0
  %1018 = vmatpush1.msra.mxu0 %v940
  %1019 = vmatprep.subr.mxu0 0.0
  %1020 = vmatpush1.msra.mxu0 %v945
  %1021 = vmatprep.subr.mxu0 0.0
  %1022 = vmatpush1.msra.mxu0 %v948
  %1023 = vmatprep.subr.mxu0 0.0
  %1024 = vmatpush1.msra.mxu0 %v953
  %1025 = vmatprep.subr.mxu0 0.0
  %1026 = vmatpush1.msra.mxu0 %v956
  %1027 = vmatprep.mubr.f32.mxu0 %v22
  %1028 = vmatmul.mubr.f32.gmra.mrb[0].mxu0 %v21
  %v1029 = vpop.f32.mrb[0].mxu0
  %v1030 = vadd.f32 %v962, %v1029
  %v1031 = vpop.f32.mrb[0].mxu0
  %1032 = vmatprep.mubr.f32.mxu0 %v24
  %1033 = vmatmul.mubr.f32.gmra.mrb[0].mxu0 %v23
  %v1034 = vpop.f32.mrb[0].mxu0
  %v1035 = vadd.f32 %v962, %v1034
  %v1036 = vpop.f32.mrb[0].mxu0
  %1037 = vmatprep.mubr.f32.mxu0 %v26
  %1038 = vmatmul.mubr.f32.gmra.mrb[0].mxu0 %v25
  %v1039 = vpop.f32.mrb[0].mxu0
  %v1040 = vadd.f32 %v962, %v1039
  %v1041 = vpop.f32.mrb[0].mxu0
  %1042 = vmatprep.mubr.f32.mxu0 %v28
  %1043 = vmatmul.mubr.f32.gmra.mrb[0].mxu0 %v27
  %v1044 = vpop.f32.mrb[0].mxu0
  %v1045 = vadd.f32 %v962, %v1044
  %v1046 = vpop.f32.mrb[0].mxu0
  %1047 = vmatprep.mubr.f32.mxu0 %v30
  %1048 = vmatmul.mubr.f32.gmra.mrb[0].mxu0 %v29
  %v1049 = vpop.f32.mrb[0].mxu0
  %v1050 = vadd.f32 %v962, %v1049
  %v1051 = vpop.f32.mrb[0].mxu0
  %1052 = vmatprep.mubr.f32.mxu0 %v32
  %1053 = vmatmul.mubr.f32.gmra.mrb[0].mxu0 %v31
  %v1054 = vpop.f32.mrb[0].mxu0
  %v1055 = vadd.f32 %v962, %v1054
  %v1056 = vpop.f32.mrb[0].mxu0
  %1057 = vmatprep.mubr.f32.mxu0 %v34
  %1058 = vmatmul.mubr.f32.gmra.mrb[0].mxu0 %v33
  %v1059 = vpop.f32.mrb[0].mxu0
  %v1060 = vadd.f32 %v962, %v1059
  %v1061 = vpop.f32.mrb[0].mxu0
  %1062 = vmatprep.mubr.f32.mxu0 %v36
  %1063 = vmatmul.mubr.f32.gmra.mrb[0].mxu0 %v35
  %v1064 = vpop.f32.mrb[0].mxu0
  %v1065 = vadd.f32 %v962, %v1064
  %v1066 = vpop.f32.mrb[0].mxu0
  %1067 = vmatprep.mubr.f32.mxu0 %v38
  %1068 = vmatmul.mubr.f32.gmra.mrb[0].mxu0 %v37
  %v1069 = vpop.f32.mrb[0].mxu0
  %v1070 = vadd.f32 %v962, %v1069
  %v1071 = vpop.f32.mrb[0].mxu0
  %1072 = vmatprep.mubr.f32.mxu0 %v40
  %1073 = vmatmul.mubr.f32.gmra.mrb[0].mxu0 %v39
  %v1074 = vpop.f32.mrb[0].mxu0
  %v1075 = vadd.f32 %v962, %v1074
  %v1076 = vpop.f32.mrb[0].mxu0
  %1077 = vmatprep.mubr.f32.mxu0 %v42
  %1078 = vmatmul.mubr.f32.gmra.mrb[0].mxu0 %v41
  %v1079 = vpop.f32.mrb[0].mxu0
  %v1080 = vadd.f32 %v962, %v1079
  %v1081 = vpop.f32.mrb[0].mxu0
  %1082 = vmatprep.mubr.f32.mxu0 %v44
  %1083 = vmatmul.mubr.f32.gmra.mrb[0].mxu0 %v43
  %v1084 = vpop.f32.mrb[0].mxu0
  %v1085 = vadd.f32 %v962, %v1084
  %v1086 = vpop.f32.mrb[0].mxu0
  %1087 = vmatprep.mubr.f32.mxu0 %v46
  %1088 = vmatmul.mubr.f32.gmra.mrb[0].mxu0 %v45
  %v1089 = vpop.f32.mrb[0].mxu0
  %v1090 = vadd.f32 %v962, %v1089
  %v1091 = vpop.f32.mrb[0].mxu0
  %1092 = vmatprep.mubr.f32.mxu0 %v48
  %1093 = vmatmul.mubr.f32.gmra.mrb[0].mxu0 %v47
  %v1094 = vpop.f32.mrb[0].mxu0
  %v1095 = vadd.f32 %v962, %v1094
  %v1096 = vpop.f32.mrb[0].mxu0
  %1097 = vmatprep.mubr.f32.mxu0 %v50
  %1098 = vmatmul.mubr.f32.gmra.mrb[0].mxu0 %v49
  %v1099 = vpop.f32.mrb[0].mxu0
  %v1100 = vadd.f32 %v962, %v1099
  %v1101 = vpop.f32.mrb[0].mxu0
  %1102 = vmatprep.mubr.f32.mxu0 %v52
  %1103 = vmatmul.mubr.f32.gmra.mrb[0].mxu0 %v51
  %v1104 = vpop.f32.mrb[0].mxu0
  %v1105 = vadd.f32 %v962, %v1104
  %v1106 = vpop.f32.mrb[0].mxu0
  %1107 = vmatprep.mubr.f32.mxu0 %v54
  %1108 = vmatmul.mubr.f32.gmra.mrb[0].mxu0 %v53
  %v1109 = vpop.f32.mrb[0].mxu0
  %v1110 = vadd.f32 %v962, %v1109
  %v1111 = vpop.f32.mrb[0].mxu0
  %1112 = vmatprep.mubr.f32.mxu0 %v56
  %1113 = vmatmul.mubr.f32.gmra.mrb[0].mxu0 %v55
  %v1114 = vpop.f32.mrb[0].mxu0
  %v1115 = vadd.f32 %v962, %v1114
  %v1116 = vpop.f32.mrb[0].mxu0
  %1117 = vmatprep.mubr.f32.mxu0 %v58
  %1118 = vmatmul.mubr.f32.gmra.mrb[0].mxu0 %v57
  %v1119 = vpop.f32.mrb[0].mxu0
  %v1120 = vadd.f32 %v962, %v1119
  %v1121 = vpop.f32.mrb[0].mxu0
  %1122 = vmatprep.mubr.f32.mxu0 %v60
  %1123 = vmatmul.mubr.f32.gmra.mrb[0].mxu0 %v59
  %v1124 = vpop.f32.mrb[0].mxu0
  %v1125 = vadd.f32 %v962, %v1124
  %v1126 = vpop.f32.mrb[0].mxu0
  %1127 = vmatprep.mubr.f32.mxu0 %v62
  %1128 = vmatmul.mubr.f32.gmra.mrb[0].mxu0 %v61
  %v1129 = vpop.f32.mrb[0].mxu0
  %v1130 = vadd.f32 %v962, %v1129
  %v1131 = vpop.f32.mrb[0].mxu0
  %1132 = vmatprep.mubr.f32.mxu0 %v64
  %1133 = vmatmul.mubr.f32.gmra.mrb[0].mxu0 %v63
  %v1134 = vpop.f32.mrb[0].mxu0
  %v1135 = vadd.f32 %v962, %v1134
  %v1136 = vpop.f32.mrb[0].mxu0
  %1137 = vmatprep.mubr.f32.mxu0 %v66
  %1138 = vmatmul.mubr.f32.gmra.mrb[0].mxu0 %v65
  %v1139 = vpop.f32.mrb[0].mxu0
  %v1140 = vadd.f32 %v962, %v1139
  %v1141 = vpop.f32.mrb[0].mxu0
  %1142 = vmatprep.mubr.f32.mxu0 %v68
  %1143 = vmatmul.mubr.f32.gmra.mrb[0].mxu0 %v67
  %v1144 = vpop.f32.mrb[0].mxu0
  %v1145 = vadd.f32 %v962, %v1144
  %v1146 = vpop.f32.mrb[0].mxu0
  %1147 = vmatprep.mubr.f32.mxu0 %v70
  %1148 = vmatmul.mubr.f32.gmra.mrb[0].mxu0 %v69
  %v1149 = vpop.f32.mrb[0].mxu0
  %v1150 = vadd.f32 %v962, %v1149
  %v1151 = vpop.f32.mrb[0].mxu0
  %1152 = vmatprep.mubr.f32.mxu0 %v72
  %1153 = vmatmul.mubr.f32.gmra.mrb[0].mxu0 %v71
  %v1154 = vpop.f32.mrb[0].mxu0
  %v1155 = vadd.f32 %v962, %v1154
  %v1156 = vpop.f32.mrb[0].mxu0
  %1157 = vmatprep.mubr.f32.mxu0 %v74
  %1158 = vmatmul.mubr.f32.gmra.mrb[0].mxu0 %v73
  %v1159 = vpop.f32.mrb[0].mxu0
  %v1160 = vadd.f32 %v962, %v1159
  %v1161 = vpop.f32.mrb[0].mxu0
  %1162 = vmatprep.mubr.f32.mxu0 %v76
  %1163 = vmatmul.mubr.f32.gmra.mrb[0].mxu0 %v75
  %v1164 = vpop.f32.mrb[0].mxu0
  %v1165 = vadd.f32 %v962, %v1164
  %v1166 = vpop.f32.mrb[0].mxu0
  %1167 = vmatprep.mubr.f32.mxu0 %v78
  %1168 = vmatmul.mubr.f32.gmra.mrb[0].mxu0 %v77
  %v1169 = vpop.f32.mrb[0].mxu0
  %v1170 = vadd.f32 %v962, %v1169
  %v1171 = vpop.f32.mrb[0].mxu0
  %1172 = vmatprep.mubr.f32.mxu0 %v80
  %1173 = vmatmul.mubr.f32.gmra.mrb[0].mxu0 %v79
  %v1174 = vpop.f32.mrb[0].mxu0
  %v1175 = vadd.f32 %v962, %v1174
  %v1176 = vpop.f32.mrb[0].mxu0
  %1177 = vmatprep.mubr.f32.mxu0 %v82
  %1178 = vmatmul.mubr.f32.gmra.mrb[0].mxu0 %v81
  %v1179 = vpop.f32.mrb[0].mxu0
  %v1180 = vadd.f32 %v962, %v1179
  %v1181 = vpop.f32.mrb[0].mxu0
  %1182 = vmatprep.mubr.f32.mxu0 %v84
  %1183 = vmatmul.mubr.f32.gmra.mrb[0].mxu0 %v83
  %v1184 = vpop.f32.mrb[0].mxu0
  %v1185 = vadd.f32 %v962, %v1184
  %v1186 = vpop.f32.mrb[0].mxu0
  %1187 = vdwg.mxu0
  %v1188 = vmax.f32 %v1030, 0.0
  %v1189 = vmax.f32 %v1035, 0.0
  %v1190 = vmax.f32 %v1040, 0.0
  %v1191 = vmax.f32 %v1045, 0.0
  %v1192 = vmax.f32 %v1050, 0.0
  %v1193 = vmax.f32 %v1055, 0.0
  %v1194 = vmax.f32 %v1060, 0.0
  %v1195 = vmax.f32 %v1065, 0.0
  %v1196 = vmax.f32 %v1070, 0.0
  %v1197 = vmax.f32 %v1075, 0.0
  %v1198 = vmax.f32 %v1080, 0.0
  %v1199 = vmax.f32 %v1085, 0.0
  %v1200 = vmax.f32 %v1090, 0.0
  %v1201 = vmax.f32 %v1095, 0.0
  %v1202 = vmax.f32 %v1100, 0.0
  %v1203 = vmax.f32 %v1105, 0.0
  %v1204 = vmax.f32 %v1110, 0.0
  %v1205 = vmax.f32 %v1115, 0.0
  %v1206 = vmax.f32 %v1120, 0.0
  %v1207 = vmax.f32 %v1125, 0.0
  %v1208 = vmax.f32 %v1130, 0.0
  %v1209 = vmax.f32 %v1135, 0.0
  %v1210 = vmax.f32 %v1140, 0.0
  %v1211 = vmax.f32 %v1145, 0.0
  %v1212 = vmax.f32 %v1150, 0.0
  %v1213 = vmax.f32 %v1155, 0.0
  %v1214 = vmax.f32 %v1160, 0.0
  %v1215 = vmax.f32 %v1165, 0.0
  %v1216 = vmax.f32 %v1170, 0.0
  %v1217 = vmax.f32 %v1175, 0.0
  %v1218 = vmax.f32 %v1180, 0.0
  %v1219 = vmax.f32 %v1185, 0.0
  %v1220 = vld [vmem:[%s4] sm:$0xff]
  %v1221 = vld [vmem:[%s4 + $0x8] sm:$0xff]
  %v1222 = vld [vmem:[%s4 + $0x10] sm:$0xff]
  %v1223 = vld [vmem:[%s4 + $0x18] sm:$0xff]
  %v1224 = vld [vmem:[%s4 + $0x20] sm:$0xff]
  %v1225 = vld [vmem:[%s4 + $0x28] sm:$0xff]
  %v1226 = vld [vmem:[%s4 + $0x30] sm:$0xff]
  %v1227 = vld [vmem:[%s4 + $0x38] sm:$0xff]
  %1228 = vmatprep.subr.mxu0 0.0
  %1229 = vmatpush1.msra.mxu0 %v1188
  %1230 = vmatprep.subr.mxu0 0.0
  %1231 = vmatpush1.msra.mxu0 %v1189
  %1232 = vmatprep.subr.mxu0 0.0
  %1233 = vmatpush1.msra.mxu0 %v1190
  %1234 = vmatprep.subr.mxu0 0.0
  %1235 = vmatpush1.msra.mxu0 %v1191
  %1236 = vmatprep.subr.mxu0 0.0
  %1237 = vmatpush1.msra.mxu0 %v1192
  %1238 = vmatprep.subr.mxu0 0.0
  %1239 = vmatpush1.msra.mxu0 %v1193
  %1240 = vmatprep.subr.mxu0 0.0
  %1241 = vmatpush1.msra.mxu0 %v1194
  %1242 = vmatprep.subr.mxu0 0.0
  %1243 = vmatpush1.msra.mxu0 %v1195
  %1244 = vmatprep.subr.mxu0 0.0
  %1245 = vmatpush1.msra.mxu0 %v1196
  %1246 = vmatprep.subr.mxu0 0.0
  %1247 = vmatpush1.msra.mxu0 %v1197
  %1248 = vmatprep.subr.mxu0 0.0
  %1249 = vmatpush1.msra.mxu0 %v1198
  %1250 = vmatprep.subr.mxu0 0.0
  %1251 = vmatpush1.msra.mxu0 %v1199
  %1252 = vmatprep.subr.mxu0 0.0
  %1253 = vmatpush1.msra.mxu0 %v1200
  %1254 = vmatprep.subr.mxu0 0.0
  %1255 = vmatpush1.msra.mxu0 %v1201
  %1256 = vmatprep.subr.mxu0 0.0
  %1257 = vmatpush1.msra.mxu0 %v1202
  %1258 = vmatprep.subr.mxu0 0.0
  %1259 = vmatpush1.msra.mxu0 %v1203
  %1260 = vmatprep.subr.mxu0 0.0
  %1261 = vmatpush1.msra.mxu0 %v1204
  %1262 = vmatprep.subr.mxu0 0.0
  %1263 = vmatpush1.msra.mxu0 %v1205
  %1264 = vmatprep.subr.mxu0 0.0
  %1265 = vmatpush1.msra.mxu0 %v1206
  %1266 = vmatprep.subr.mxu0 0.0
  %1267 = vmatpush1.msra.mxu0 %v1207
  %1268 = vmatprep.subr.mxu0 0.0
  %1269 = vmatpush1.msra.mxu0 %v1208
  %1270 = vmatprep.subr.mxu0 0.0
  %1271 = vmatpush1.msra.mxu0 %v1209
  %1272 = vmatprep.subr.mxu0 0.0
  %1273 = vmatpush1.msra.mxu0 %v1210
  %1274 = vmatprep.subr.mxu0 0.0
  %1275 = vmatpush1.msra.mxu0 %v1211
  %1276 = vmatprep.subr.mxu0 0.0
  %1277 = vmatpush1.msra.mxu0 %v1212
  %1278 = vmatprep.subr.mxu0 0.0
  %1279 = vmatpush1.msra.mxu0 %v1213
  %1280 = vmatprep.subr.mxu0 0.0
  %1281 = vmatpush1.msra.mxu0 %v1214
  %1282 = vmatprep.subr.mxu0 0.0
  %1283 = vmatpush1.msra.mxu0 %v1215
  %1284 = vmatprep.subr.mxu0 0.0
  %1285 = vmatpush1.msra.mxu0 %v1216
  %1286 = vmatprep.subr.mxu0 0.0
  %1287 = vmatpush1.msra.mxu0 %v1217
  %1288 = vmatprep.subr.mxu0 0.0
  %1289 = vmatpush1.msra.mxu0 %v1218
  %1290 = vmatprep.subr.mxu0 0.0
  %1291 = vmatpush1.msra.mxu0 %v1219
  %1292 = vmatprep.mubr.f32.mxu0 %v1221
  %1293 = vmatmul.mubr.f32.gmra.mrb[0].mxu0 %v1220
  %v1294 = vpop.f32.mrb[0].mxu0
  %v1295 = vadd.f32 0.0, %v1294
  %v1296 = vpop.f32.mrb[0].mxu0
  %1297 = vmatprep.mubr.f32.mxu0 %v1223
  %1298 = vmatmul.mubr.f32.gmra.mrb[0].mxu0 %v1222
  %v1299 = vpop.f32.mrb[0].mxu0
  %v1300 = vadd.f32 0.0, %v1299
  %v1301 = vpop.f32.mrb[0].mxu0
  %1302 = vmatprep.mubr.f32.mxu0 %v1225
  %1303 = vmatmul.mubr.f32.gmra.mrb[0].mxu0 %v1224
  %v1304 = vpop.f32.mrb[0].mxu0
  %v1305 = vadd.f32 0.0, %v1304
  %v1306 = vpop.f32.mrb[0].mxu0
  %1307 = vmatprep.mubr.f32.mxu0 %v1227
  %1308 = vmatmul.mubr.f32.gmra.mrb[0].mxu0 %v1226
  %v1309 = vpop.f32.mrb[0].mxu0
  %v1310 = vadd.f32 0.0, %v1309
  %v1311 = vpop.f32.mrb[0].mxu0
  %1312 = vdwg.mxu0
  %v1313 = vpack.c.bf16 %v1300, %v1295
  %v1314 = vpack.c.bf16 %v1310, %v1305
  %v1315 = vlaneseq
  %v1316 = vshrl.u32 %v1315, 7
  %v1317 = vsub.s32 0, %v1316
  %v1318 = vrot.slane %v135, %v1317
  %v1335 = vunpack.c.l.b16 %v117
  %v1336 = vunpack.c.l.b16 %v118
  %v1337 = vunpack.c.l.b16 %v119
  %v1338 = vunpack.c.l.b16 %v120
  %v1339 = vunpack.c.l.b16 %v121
  %v1340 = vunpack.c.l.b16 %v122
  %v1341 = vunpack.c.l.b16 %v123
  %v1342 = vunpack.c.l.b16 %v124
  %v1343 = vunpack.c.l.b16 %v125
  %v1344 = vunpack.c.l.b16 %v126
  %v1345 = vunpack.c.l.b16 %v127
  %v1346 = vunpack.c.l.b16 %v128
  %v1347 = vunpack.c.l.b16 %v129
  %v1348 = vunpack.c.l.b16 %v130
  %v1349 = vunpack.c.l.b16 %v131
  %v1350 = vunpack.c.l.b16 %v132
  %v1351 = vpack.c.b16 %v1336, %v1335
  %v1352 = vpack.c.b16 %v1338, %v1337
  %v1353 = vpack.c.b16 %v1340, %v1339
  %v1354 = vpack.c.b16 %v1342, %v1341
  %v1355 = vpack.c.b16 %v1344, %v1343
  %v1356 = vpack.c.b16 %v1346, %v1345
  %v1357 = vpack.c.b16 %v1348, %v1347
  %v1358 = vpack.c.b16 %v1350, %v1349
  %1367 = vmatprep.subr.bf16.mxu0 0
  %1368 = vmatpush1.bf16.msra.mxu0 %v1351
  %1369 = vmatprep.subr.bf16.mxu0 0
  %1370 = vmatpush1.bf16.msra.mxu0 %v1352
  %1371 = vmatprep.subr.bf16.mxu0 0
  %1372 = vmatpush1.bf16.msra.mxu0 %v1353
  %1373 = vmatprep.subr.bf16.mxu0 0
  %1374 = vmatpush1.bf16.msra.mxu0 %v1354
  %1375 = vmatprep.subr.bf16.mxu0 0
  %1376 = vmatpush1.bf16.msra.mxu0 %v1355
  %1377 = vmatprep.subr.bf16.mxu0 0
  %1378 = vmatpush1.bf16.msra.mxu0 %v1356
  %1379 = vmatprep.subr.bf16.mxu0 0
  %1380 = vmatpush1.bf16.msra.mxu0 %v1357
  %1381 = vmatprep.subr.bf16.mxu0 0
  %1382 = vmatpush1.bf16.msra.mxu0 %v1358
  %1383 = vmatprep.subr.bf16.mxu0 0
  %1384 = vmatpush1.bf16.msra.mxu0 0
  %1385 = vmatprep.subr.bf16.mxu0 0
  %1386 = vmatpush1.bf16.msra.mxu0 0
  %1387 = vmatprep.subr.bf16.mxu0 0
  %1388 = vmatpush1.bf16.msra.mxu0 0
  %1389 = vmatprep.subr.bf16.mxu0 0
  %1390 = vmatpush1.bf16.msra.mxu0 0
  %1391 = vmatprep.subr.bf16.mxu0 0
  %1392 = vmatpush1.bf16.msra.mxu0 0
  %1393 = vmatprep.subr.bf16.mxu0 0
  %1394 = vmatpush1.bf16.msra.mxu0 0
  %1395 = vmatprep.subr.bf16.mxu0 0
  %1396 = vmatpush1.bf16.msra.mxu0 0
  %1397 = vmatprep.subr.bf16.mxu0 0
  %1398 = vmatpush1.bf16.msra.mxu0 0
  %1399 = vmatprep.mubr.bf16.mxu0 0
  %1400 = vmatmul.mubr.bf16.gmra.mrb[0].mxu0 %v1313
  %v1401 = vpop.f32.mrb[0].mxu0
  %v1402 = vadd.f32 %v1318, %v1401
  %v1403 = vpop.f32.mrb[0].mxu0
  %v1404 = vpop.f32.mrb[0].mxu0
  %v1405 = vadd.f32 %v1318, %v1404
  %v1406 = vpop.f32.mrb[0].mxu0
  %1407 = vmatprep.mubr.bf16.mxu0 0
  %1408 = vmatmul.mubr.bf16.gmra.mrb[0].mxu0 %v1314
  %v1409 = vpop.f32.mrb[0].mxu0
  %v1410 = vadd.f32 %v1318, %v1409
  %v1411 = vpop.f32.mrb[0].mxu0
  %v1412 = vpop.f32.mrb[0].mxu0
  %v1413 = vadd.f32 %v1318, %v1412
  %v1414 = vpop.f32.mrb[0].mxu0
  %1415 = vdwg.mxu0
  %v1416 = vlaneseq
  %v1417 = vand.u32 %v1416, 127
  %vm1418 = vcmp.ge.s32.totalorder %v1417, 1
  %vm1419 = vcmp.le.s32.totalorder %v1417, 32
  %vm1420 = vmand %vm1418, %vm1419
  %v1421 = vsel %vm1420, %v1402, -1e+30
  %v1422 = vsel %vm1420, %v1405, -1e+30
  %v1423 = vsel %vm1420, %v1410, -1e+30
  %v1424 = vsel %vm1420, %v1413, -1e+30
  %1425 = vmax.xlane.f32.xlu0 %v1421
  %v1426 = vpop.xlane.xlu0 %1425
  %1427 = vmax.xlane.f32.xlu0 %v1422
  %v1428 = vpop.xlane.xlu0 %1427
  %1429 = vmax.xlane.f32.xlu0 %v1423
  %v1430 = vpop.xlane.xlu0 %1429
  %1431 = vmax.xlane.f32.xlu0 %v1424
  %v1432 = vpop.xlane.xlu0 %1431
  %v1433 = vsub.f32 %v1421, %v1426
  %v1434 = vsub.f32 %v1422, %v1428
  %v1435 = vsub.f32 %v1423, %v1430
  %v1436 = vsub.f32 %v1424, %v1432
  %v1437 = vmul.f32 %v1433, 1.442695
  %v1438 = vpow.pop %v1437
  %v1439 = vmul.f32 %v1434, 1.442695
  %v1440 = vpow.pop %v1439
  %v1441 = vmul.f32 %v1435, 1.442695
  %v1442 = vpow.pop %v1441
  %v1443 = vmul.f32 %v1436, 1.442695
  %v1444 = vpow.pop %v1443
  %1445 = vadd.xlane.f32.xlu0 %v1438
  %v1446 = vpop.xlane.xlu0 %1445
  %1447 = vadd.xlane.f32.xlu0 %v1440
  %v1448 = vpop.xlane.xlu0 %1447
  %1449 = vadd.xlane.f32.xlu0 %v1442
  %v1450 = vpop.xlane.xlu0 %1449
  %1451 = vadd.xlane.f32.xlu0 %v1444
  %v1452 = vpop.xlane.xlu0 %1451
  %v1453 = vrcp.pop %v1446
  %v1454 = vrcp.pop %v1448
  %v1455 = vrcp.pop %v1450
  %v1456 = vrcp.pop %v1452
  %v1457 = vmul.f32 %v1438, %v1453
  %v1458 = vmul.f32 %v1440, %v1454
  %v1459 = vmul.f32 %v1442, %v1455
  %v1460 = vmul.f32 %v1444, %v1456
  %vm1461 = vcmp.eq.s32.totalorder %v1417, 0
  %v1462 = vtanh.pop %v1402
  %v1463 = vtanh.pop %v1405
  %v1464 = vtanh.pop %v1410
  %v1465 = vtanh.pop %v1413
  %v1466 = vsel %vm1461, %v1462, %v1457
  %v1467 = vsel %vm1461, %v1463, %v1458
  %v1468 = vsel %vm1461, %v1464, %v1459
  %v1469 = vsel %vm1461, %v1465, %v1460
  %1470 = vst [vmem:[%s5] sm:$0xff] %v1466
  %1471 = vst [vmem:[%s5 + $0x8] sm:$0xff] %v1467
  %1472 = vst [vmem:[%s5 + $0x10] sm:$0xff] %v1468
  %1473 = vst [vmem:[%s5 + $0x18] sm:$0xff] %v1469
  // Predicated region
  $region22: #{hive_gnn_forward.1} parent=0 // pred_check
    _
  $region23: #{hive_gnn_forward.1} parent=0 // pred_check_branch
    %1475 = sbr.rel (0) target = $region25
  $region24: #{hive_gnn_forward.1} parent=0 // pred_region
    _
  $region25: #{hive_gnn_forward.1} parent=0 // pred_fallthru
    _
  // Predicated region
  $region26: #{hive_gnn_forward.1} parent=0 // pred_check
    _
  $region27: #{hive_gnn_forward.1} parent=0 // pred_check_branch
    %1477 = sbr.rel (0) target = $region29
  $region28: #{hive_gnn_forward.1} parent=0 // pred_region
    _
  $region29: #{hive_gnn_forward.1} parent=0 // pred_fallthru
    _

</llo_original>
